<compile_context>
chip_gen: v7x
topology: tpu7x:2x2x1
jax: 0.10.0
libtpu: 0.0.40
codegen_flags: <defaults>
</compile_context>

<pallas_src>
import jax
import jax.numpy as jnp
from jax.experimental import pallas as pl
from jax.experimental.pallas import tpu as pltpu


def _round_up(x, m):
    return ((x + m - 1) // m) * m


def _face_model_kernel(x_ref, w1_ref, b1_ref, w2_ref, b2_ref, o_ref, feat_acc):
    """feat = x @ W1 + b1 (K-tiled, f32 acc); out = feat @ W2 + b2 at last K."""
    k = pl.program_id(1)

    @pl.when(k == 0)
    def _():
        feat_acc[...] = jnp.zeros_like(feat_acc)

    # Backbone projection chunk: (TM, TK) x (TK, 512), accumulate in f32.
    feat_acc[...] += jnp.dot(x_ref[...], w1_ref[...],
                             preferred_element_type=jnp.float32)

    @pl.when(k == pl.num_programs(1) - 1)
    def _():
        feat = feat_acc[...] + b1_ref[...]                      # (TM, 512) f32
        # Head: nn.Linear(512, 489), padded to 512 lanes in the wrapper.
        out = jnp.dot(feat.astype(w2_ref.dtype), w2_ref[...],
                      preferred_element_type=jnp.float32)
        o_ref[...] = (out + b2_ref[...]).astype(o_ref.dtype)    # (TM, 512)


def prepare_face_model_params(w_backbone, b_backbone, w_head, b_head, *, tk=512):
    """One-time weight preprocessing (hoisted out of the per-call wrapper).

    w_backbone: (C*H*W, 512), b_backbone: (512,)
    w_head:     (512, 489),   b_head:     (489,)
    """
    d_in, feat_dim = w_backbone.shape
    out_dim = w_head.shape[1]
    out_pad = _round_up(out_dim, 128)                 # 489 -> 512, lane-dense
    tk = tk if d_in >= tk else _round_up(d_in, 128)   # K tile (multiple of 128)
    d_in_pad = _round_up(d_in, tk)

    # bf16 weights for the MXU (f32 accumulation in-kernel); f32 biases.
    w1 = jnp.pad(w_backbone, ((0, d_in_pad - d_in), (0, 0))).astype(jnp.bfloat16)
    b1 = b_backbone.reshape(1, feat_dim).astype(jnp.float32)
    w2 = jnp.pad(w_head, ((0, 0), (0, out_pad - out_dim))).astype(jnp.bfloat16)
    b2 = jnp.pad(b_head, (0, out_pad - out_dim)).reshape(1, out_pad).astype(jnp.float32)
    return dict(w1=w1, b1=b1, w2=w2, b2=b2,
                d_in=d_in, d_in_pad=d_in_pad, tk=tk,
                feat_dim=feat_dim, out_dim=out_dim, out_pad=out_pad)


def face_model_student_forward(data, label, params, *, logits_dtype=jnp.float32):
    """JAX wrapper mirroring FaceModel_student.forward(data, label).

    data:  (N, C, H, W) float32 (NCHW, as in PyTorch); label unused by forward.
    params: output of prepare_face_model_params().
    returns: cos_theta_student with shape (N, 489), logits_dtype.
    """
    del label  # forward() does not use the label

    n = data.shape[0]
    d_in = data.shape[1] * data.shape[2] * data.shape[3]
    assert d_in == params["d_in"], "data does not match prepared backbone weights"
    d_in_pad, tk = params["d_in_pad"], params["tk"]
    feat_dim, out_dim, out_pad = params["feat_dim"], params["out_dim"], params["out_pad"]
    w1, b1, w2, b2 = params["w1"], params["b1"], params["w2"], params["b2"]

    # Batch tile: >=256 fills the v6e/v7x 2x256^2 MXU M dimension per weight
    # pass and amortizes per-grid-step overhead; small batches round up to a
    # multiple of 16 (bf16 packs 16 sublanes per vreg).
    if n >= 512:
        tm = 512
    elif n >= 256:
        tm = 256
    else:
        tm = _round_up(n, 16)
    n_pad = _round_up(n, tm)

    # bf16 activations for the MXU; zero-pad batch and d_in (exact: padded x
    # columns line up with zero-padded W1 rows).
    x2d = data.reshape(n, d_in).astype(jnp.bfloat16)
    x2d = jnp.pad(x2d, ((0, n_pad - n), (0, d_in_pad - d_in)))

    grid = (n_pad // tm, d_in_pad // tk)   # (batch-parallel, K-reduction)

    flops = 2 * n_pad * (d_in_pad * feat_dim + feat_dim * out_pad)
    bytes_accessed = (
        (w1.size + w2.size) * 2                               # bf16 weights
        + (b1.size + b2.size) * 4                             # f32 biases
        + n_pad * d_in_pad * 2                                # bf16 activations in
        + n_pad * out_pad * jnp.dtype(logits_dtype).itemsize  # logits out
    )
    cost = pl.CostEstimate(flops=flops, transcendentals=0,
                           bytes_accessed=bytes_accessed)

    out_padded = pl.pallas_call(
        _face_model_kernel,
        out_shape=jax.ShapeDtypeStruct((n_pad, out_pad), logits_dtype),
        grid=grid,
        in_specs=[
            pl.BlockSpec((tm, tk), lambda i, k: (i, k)),            # x tile
            pl.BlockSpec((tk, feat_dim), lambda i, k: (k, 0)),      # W1 K-tile (streamed)
            pl.BlockSpec((1, feat_dim), lambda i, k: (0, 0),        # b1: constant, 1 buffer
                         pipeline_mode=pl.Buffered(1)),
            pl.BlockSpec((feat_dim, out_pad), lambda i, k: (0, 0),  # W2: constant, 1 buffer
                         pipeline_mode=pl.Buffered(1)),
            pl.BlockSpec((1, out_pad), lambda i, k: (0, 0),         # b2: constant, 1 buffer
                         pipeline_mode=pl.Buffered(1)),
        ],
        out_specs=pl.BlockSpec((tm, out_pad), lambda i, k: (i, 0)),
        scratch_shapes=[pltpu.VMEM((tm, feat_dim), jnp.float32)],   # feat accumulator
        compiler_params=pltpu.CompilerParams(
            dimension_semantics=("parallel", "arbitrary")),
        cost_estimate=cost,
    )(x2d, w1, b1, w2, b2)

    # Strip batch + lane padding -> (N, 489).
    return out_padded[:n, :out_dim]


if __name__ == "__main__":
    # Small shapes consistent with the module's forward: NCHW image batch.
    N, C, H, W = 2, 4, 16, 16
    D_IN = C * H * W          # 1024 -> two K grid steps (exercises the accumulator)
    FEAT = 512                # backbone output feature dim
    NUM_CLASSES = 489         # head output dim (nn.Linear(512, 489))

    key = jax.random.PRNGKey(0)
    k_data, k_w1, k_b1, k_w2, k_b2 = jax.random.split(key, 5)

    data = jax.random.normal(k_data, (N, C, H, W), dtype=jnp.float32)
    label = jnp.zeros((N,), dtype=jnp.int32)  # unused by forward

    # Deterministic parameter init (PyTorch nn.Linear-style uniform bounds).
    bound1 = 1.0 / jnp.sqrt(jnp.float32(D_IN))
    w_backbone = jax.random.uniform(k_w1, (D_IN, FEAT), jnp.float32, -bound1, bound1)
    b_backbone = jax.random.uniform(k_b1, (FEAT,), jnp.float32, -bound1, bound1)

    bound2 = 1.0 / jnp.sqrt(jnp.float32(FEAT))
    w_head = jax.random.uniform(k_w2, (FEAT, NUM_CLASSES), jnp.float32, -bound2, bound2)
    b_head = jax.random.uniform(k_b2, (NUM_CLASSES,), jnp.float32, -bound2, bound2)

    # One-time weight preprocessing (pad/cast), then the per-call forward.
    params = prepare_face_model_params(w_backbone, b_backbone, w_head, b_head)

    cos_theta_student = face_model_student_forward(data, label, params)
    cos_theta_student = jax.block_until_ready(cos_theta_student)
    assert cos_theta_student.shape == (N, NUM_CLASSES)
    assert cos_theta_student.dtype == jnp.float32

    # Reference 1: pure-JAX with the same bf16 casts / f32 accumulation.
    x2d = data.reshape(N, D_IN).astype(jnp.bfloat16)
    feat_ref = jnp.dot(x2d, w_backbone.astype(jnp.bfloat16),
                       preferred_element_type=jnp.float32) + b_backbone
    ref_bf16 = jnp.dot(feat_ref.astype(jnp.bfloat16), w_head.astype(jnp.bfloat16),
                       preferred_element_type=jnp.float32) + b_head
    assert jnp.allclose(cos_theta_student, ref_bf16, atol=2e-2, rtol=2e-2)

    # Reference 2: full-f32 math, loose tolerance for the bf16 casts.
    ref_f32 = data.reshape(N, D_IN) @ w_backbone + b_backbone
    ref_f32 = ref_f32 @ w_head + b_head
    assert jnp.allclose(cos_theta_student, ref_f32, atol=5e-2, rtol=5e-2)

    print("KERNEL_OK")
</pallas_src>

<mosaic_0001>
module attributes {stable_mosaic.version = 11 : i64} {
  func.func @_face_model_kernel(%arg0: i32, %arg1: i32, %arg2: memref<16x512xbf16, #tpu.memory_space<vmem>>, %arg3: memref<512x512xbf16, #tpu.memory_space<vmem>>, %arg4: memref<1x512xf32, #tpu.memory_space<vmem>>, %arg5: memref<512x512xbf16, #tpu.memory_space<vmem>>, %arg6: memref<1x512xf32, #tpu.memory_space<vmem>>, %arg7: memref<16x512xf32, #tpu.memory_space<vmem>>, %arg8: memref<16x512xf32, #tpu.memory_space<vmem>>) attributes {dimension_semantics = [#tpu.dimension_semantics<parallel>, #tpu.dimension_semantics<arbitrary>], iteration_bounds = array<i64: 1, 2>, scalar_prefetch = 0 : i64, scratch_operands = 1 : i64, tpu.core_type = #tpu.core_type<tc>, window_params = [{transform_indices = @transform_0, window_bounds = array<i64: 16, 512>}, {transform_indices = @transform_1, window_bounds = array<i64: 512, 512>}, {pipeline_mode = #tpu.pipeline_mode<synchronous>, transform_indices = @transform_2, window_bounds = array<i64: 1, 512>}, {pipeline_mode = #tpu.pipeline_mode<synchronous>, transform_indices = @transform_3, window_bounds = array<i64: 512, 512>}, {pipeline_mode = #tpu.pipeline_mode<synchronous>, transform_indices = @transform_4, window_bounds = array<i64: 1, 512>}, {transform_indices = @transform_5, window_bounds = array<i64: 16, 512>}]} {
    %c0_i32 = arith.constant 0 : i32
    %0 = arith.cmpi eq, %arg1, %c0_i32 : i32
    %1 = arith.extui %0 : i1 to i32
    %c0_i32_0 = arith.constant 0 : i32
    %2 = arith.cmpi ne, %1, %c0_i32_0 : i32
    scf.if %2 {
      %cst_9 = arith.constant 0.000000e+00 : f32
      %12 = vector.broadcast %cst_9 : f32 to vector<16x512xf32>
      %c0_10 = arith.constant 0 : index
      %c0_11 = arith.constant 0 : index
      %13 = vector.load %arg8[%c0_10, %c0_11] : memref<16x512xf32, #tpu.memory_space<vmem>>, vector<16x512xf32>
      tpu.vector_store %arg8[%c0_10, %c0_11], %12 {strides = array<i32>} : memref<16x512xf32, #tpu.memory_space<vmem>>, vector<16x512xf32>,
    } else {
    }
    %c0 = arith.constant 0 : index
    %c0_1 = arith.constant 0 : index
    %3 = vector.load %arg8[%c0, %c0_1] : memref<16x512xf32, #tpu.memory_space<vmem>>, vector<16x512xf32>
    %c0_2 = arith.constant 0 : index
    %c0_3 = arith.constant 0 : index
    %4 = vector.load %arg2[%c0_2, %c0_3] : memref<16x512xbf16, #tpu.memory_space<vmem>>, vector<16x512xbf16>
    %c0_4 = arith.constant 0 : index
    %c0_5 = arith.constant 0 : index
    %5 = vector.load %arg3[%c0_4, %c0_5] : memref<512x512xbf16, #tpu.memory_space<vmem>>, vector<512x512xbf16>
    %cst = arith.constant dense<0.000000e+00> : vector<16x512xf32>
    %6 = tpu.matmul %4, %5, %cst {dimension_numbers = #tpu.dot_dimension_numbers<[1], [0], [0], [1], [0, 0, 1, 1], [], []>} : vector<16x512xbf16>, vector<512x512xbf16>, vector<16x512xf32> -> vector<16x512xf32>
    %7 = arith.addf %3, %6 : vector<16x512xf32>
    %c0_6 = arith.constant 0 : index
    %c0_7 = arith.constant 0 : index
    %8 = vector.load %arg8[%c0_6, %c0_7] : memref<16x512xf32, #tpu.memory_space<vmem>>, vector<16x512xf32>
    tpu.vector_store %arg8[%c0_6, %c0_7], %7 {strides = array<i32>} : memref<16x512xf32, #tpu.memory_space<vmem>>, vector<16x512xf32>,
    %c1_i32 = arith.constant 1 : i32
    %9 = arith.cmpi eq, %arg1, %c1_i32 : i32
    %10 = arith.extui %9 : i1 to i32
    %c0_i32_8 = arith.constant 0 : i32
    %11 = arith.cmpi ne, %10, %c0_i32_8 : i32
    scf.if %11 {
      %c0_9 = arith.constant 0 : index
      %c0_10 = arith.constant 0 : index
      %12 = vector.load %arg8[%c0_9, %c0_10] : memref<16x512xf32, #tpu.memory_space<vmem>>, vector<16x512xf32>
      %c0_11 = arith.constant 0 : index
      %c0_12 = arith.constant 0 : index
      %13 = vector.load %arg4[%c0_11, %c0_12] : memref<1x512xf32, #tpu.memory_space<vmem>>, vector<1x512xf32>
      %14 = vector.broadcast %13 : vector<1x512xf32> to vector<16x512xf32>
      %15 = arith.addf %12, %14 : vector<16x512xf32>
      %16 = arith.truncf %15 : vector<16x512xf32> to vector<16x512xbf16>
      %c0_13 = arith.constant 0 : index
      %c0_14 = arith.constant 0 : index
      %17 = vector.load %arg5[%c0_13, %c0_14] : memref<512x512xbf16, #tpu.memory_space<vmem>>, vector<512x512xbf16>
      %cst_15 = arith.constant dense<0.000000e+00> : vector<16x512xf32>
      %18 = tpu.matmul %16, %17, %cst_15 {dimension_numbers = #tpu.dot_dimension_numbers<[1], [0], [0], [1], [0, 0, 1, 1], [], []>} : vector<16x512xbf16>, vector<512x512xbf16>, vector<16x512xf32> -> vector<16x512xf32>
      %c0_16 = arith.constant 0 : index
      %c0_17 = arith.constant 0 : index
      %19 = vector.load %arg6[%c0_16, %c0_17] : memref<1x512xf32, #tpu.memory_space<vmem>>, vector<1x512xf32>
      %20 = vector.broadcast %19 : vector<1x512xf32> to vector<16x512xf32>
      %21 = arith.addf %18, %20 : vector<16x512xf32>
      %c0_18 = arith.constant 0 : index
      %c0_19 = arith.constant 0 : index
      %22 = vector.load %arg7[%c0_18, %c0_19] : memref<16x512xf32, #tpu.memory_space<vmem>>, vector<16x512xf32>
      tpu.vector_store %arg7[%c0_18, %c0_19], %21 {strides = array<i32>} : memref<16x512xf32, #tpu.memory_space<vmem>>, vector<16x512xf32>,
    } else {
    }
    return
  }
  func.func @transform_0(%arg0: i32, %arg1: i32) -> (i32, i32) {
    %c0_i32 = arith.constant 0 : i32
    return %arg0, %arg1 : i32, i32
  }
  func.func @transform_1(%arg0: i32, %arg1: i32) -> (i32, i32) {
    %c0_i32 = arith.constant 0 : i32
    %c0_i32_0 = arith.constant 0 : i32
    return %arg1, %c0_i32 : i32, i32
  }
  func.func @transform_2(%arg0: i32, %arg1: i32) -> (i32, i32) {
    %c0_i32 = arith.constant 0 : i32
    %c0_i32_0 = arith.constant 0 : i32
    %c0_i32_1 = arith.constant 0 : i32
    return %c0_i32, %c0_i32_0 : i32, i32
  }
  func.func @transform_3(%arg0: i32, %arg1: i32) -> (i32, i32) {
    %c0_i32 = arith.constant 0 : i32
    %c0_i32_0 = arith.constant 0 : i32
    %c0_i32_1 = arith.constant 0 : i32
    return %c0_i32, %c0_i32_0 : i32, i32
  }
  func.func @transform_4(%arg0: i32, %arg1: i32) -> (i32, i32) {
    %c0_i32 = arith.constant 0 : i32
    %c0_i32_0 = arith.constant 0 : i32
    %c0_i32_1 = arith.constant 0 : i32
    return %c0_i32, %c0_i32_0 : i32, i32
  }
  func.func @transform_5(%arg0: i32, %arg1: i32) -> (i32, i32) {
    %c0_i32 = arith.constant 0 : i32
    %c0_i32_0 = arith.constant 0 : i32
    return %arg0, %c0_i32 : i32, i32
  }
}

</mosaic_0001>

<llo_original>
// kernel: tpu_custom_call.1
$region0: #{tpu_custom_call.1}
  #allocation0 [shape = 'u32[]', space=smem, size = 0x4, offset = 0x4, fixed_abs, tag = 'smem constant byte address 0x4 - core index']
  #allocation1 [shape = 'u32[144,128]{1,0:T(1,128)}', space=vmem, size = 0x12000, scoped, tag = 'internal scratch']
  #allocation2 [shape = 'f32[16,512]{1,0:T(8,128)}', space=vmem, size = 0x8000, scoped, tag = 'scratch operand']
  %s0 = inlined_call_operand.hbm [shape: bf16[16,1024], index: 0, kind: input, shape index: {}]
  %s1 = inlined_call_operand.hbm [shape: bf16[1024,512], index: 1, kind: input, shape index: {}]
  %s2 = inlined_call_operand.vmem [shape: f32[1,512], index: 2, kind: input, shape index: {}]
  %s3 = inlined_call_operand.hbm [shape: bf16[512,512], index: 3, kind: input, shape index: {}]
  %s4 = inlined_call_operand.vmem [shape: f32[1,512], index: 4, kind: input, shape index: {}]
  %s5 = inlined_call_operand.hbm [shape: f32[16,512], index: 5, kind: output, shape index: {}]
  %s6 = sld [smem:[#allocation0]]
  $region73: #{tpu_custom_call.1} parent=0
    _
  %s8 = ssub.s32 1, %s6
  %s9 = scalar_select 0, %s8, %s6
  $region1: #{tpu_custom_call.1} parent=0
    #allocation3 [shape = 'u8[32768]{0}', space=vmem, size = 0x8000, scoped, tag = 'input window, operand 0']
    #allocation4 [shape = 's32[2]{0}', space=sflag, size = 0x8, scoped, tag = 'scoped memory for tpu_custom_call.1']
    #allocation5 [shape = 's32[2]{0}', space=sflag, size = 0x8, scoped, tag = 'scoped memory for tpu_custom_call.1']
    #allocation6 [shape = 'u8[1048576]{0}', space=vmem, size = 0x100000, scoped, tag = 'input window, operand 1']
    #allocation7 [shape = 's32[2]{0}', space=sflag, size = 0x8, scoped, tag = 'scoped memory for tpu_custom_call.1']
    #allocation8 [shape = 'u8[524288]{0}', space=vmem, size = 0x80000, scoped, tag = 'input window, operand 3, single buffered']
    #allocation9 [shape = 'u8[32768]{0}', space=vmem, size = 0x8000, scoped, tag = 'output window, operand 0, single buffered']
    %10 = vsyncpa [#allocation4], 0
    %s11 = scalar_lea.sflag [#allocation4], 1
    %12 = vsyncpa %s11, 0
    %13 = vsyncpa [#allocation7], 0
    %s14 = scalar_lea.sflag [#allocation7], 1
    %15 = vsyncpa %s14, 0
    %16 = vsyncpa [#allocation5], 0
    loop: start=0, step=1, limit=4
    $region2: #{tpu_custom_call.1} parent=1 // loop_pre_header
      _
    $region3: #{tpu_custom_call.1} parent=1 // loop_header
      %s18 = sphi 0, %s22
      %p19 = scmp.ge.s32.totalorder %s18, 4
      %s25 = sphi 0, %s37
      %s26 = sphi 0, %s33
      %s27 = sphi 0, %s25
      %s28 = sphi 0, %s26
      %s29 = sphi 0, %s27
      %s30 = sphi 0, %s28
      %s42 = sphi 0, %s44
      %s45 = sphi 0, %s42
      %s46 = sphi 0, %s45
      %s62 = sphi 0, %s46
      %s68 = sphi 0, %s70
      %s71 = sphi 0, %s68
      %s72 = sphi 0, %s71
      %s88 = sphi 0, %s72
      %s92 = sphi 0, %s92
      %s94 = sphi 0, %s92
      %s95 = sphi 0, %s94
      %s109 = sphi 0, %s95
      %s113 = sphi 0, %s113
      %s115 = sphi 0, %s113
      %s116 = sphi 0, %s115
      %s130 = sphi 0, %s116
      %s134 = sphi 0, %s134
      %s136 = sphi 0, %s134
      %s137 = sphi 0, %s136
      %s151 = sphi 0, %s137
      %s157 = sphi 0, %s159
      %s160 = sphi 0, %s157
      %s161 = sphi 0, %s160
      %s177 = sphi 0, %s161
    $region4: #{tpu_custom_call.1} parent=1 // loop_header_branch
      %21 = sbr.rel (%p19) target = $region8
    $region5: #{tpu_custom_call.1} parent=1 // loop_body
      %s23 = ssub.s32 %s18, 1
      %s24 = ssub.s32 %s18, 2
      %s31 = sadd.s32 1, %s26
      %p32 = scmp.ge.s32.totalorder %s31, 2
      %s33 = scalar_select %p32, 0, %s31
      %s34 = sadd.s32 1, %s25
      %s35 = scalar_select %p32, %s34, %s25
      %p36 = scmp.ge.s32.totalorder %s35, 1
      %s37 = scalar_select %p36, 0, %s35
      %s38 = ssub.s32 %s25, %s37
      %s39 = ssub.s32 %s26, %s33
      %s40 = sor.u32 %s38, %s39
      %p41 = scmp.eq.s32.totalorder %s40, 0
      %s43 = sadd.s32 %s42, 1
      %s44 = scalar_select %p41, %s42, %s43
      %p47 = pneg %p41
      %p48 = scmp.eq.s32.totalorder %s18, 1
      %p49 = por %p47, %p48
      %p50 = scmp.ne.s32.totalorder %s42, %s45
      %p51 = scmp.eq.s32.totalorder %s18, 0
      %p52 = por %p50, %p51
      %p53 = scmp.ne.s32.totalorder %s42, %s45
      %p54 = scmp.eq.s32.totalorder %s23, 1
      %p55 = por %p53, %p54
      %p56 = scmp.ne.s32.totalorder %s45, %s46
      %p57 = scmp.eq.s32.totalorder %s23, 0
      %p58 = por %p56, %p57
      %p59 = scmp.ne.s32.totalorder %s45, %s46
      %p60 = scmp.eq.s32.totalorder %s24, 1
      %p61 = por %p59, %p60
      %p63 = scmp.ne.s32.totalorder %s46, %s62
      %p64 = scmp.eq.s32.totalorder %s24, 0
      %p65 = por %p63, %p64
      %s66 = ssub.s32 %s26, %s33
      %p67 = scmp.eq.s32.totalorder %s66, 0
      %s69 = sadd.s32 %s68, 1
      %s70 = scalar_select %p67, %s68, %s69
      %p73 = pneg %p67
      %p74 = scmp.eq.s32.totalorder %s18, 1
      %p75 = por %p73, %p74
      %p76 = scmp.ne.s32.totalorder %s68, %s71
      %p77 = scmp.eq.s32.totalorder %s18, 0
      %p78 = por %p76, %p77
      %p79 = scmp.ne.s32.totalorder %s68, %s71
      %p80 = scmp.eq.s32.totalorder %s23, 1
      %p81 = por %p79, %p80
      %p82 = scmp.ne.s32.totalorder %s71, %s72
      %p83 = scmp.eq.s32.totalorder %s23, 0
      %p84 = por %p82, %p83
      %p85 = scmp.ne.s32.totalorder %s71, %s72
      %p86 = scmp.eq.s32.totalorder %s24, 1
      %p87 = por %p85, %p86
      %p89 = scmp.ne.s32.totalorder %s72, %s88
      %p90 = scmp.eq.s32.totalorder %s24, 0
      %p91 = por %p89, %p90
      %s93 = sadd.s32 %s92, 1
      %p96 = scmp.eq.s32.totalorder %s18, 1
      %p97 = scmp.ne.s32.totalorder %s92, %s94
      %p98 = scmp.eq.s32.totalorder %s18, 0
      %p99 = por %p97, %p98
      %p100 = scmp.ne.s32.totalorder %s92, %s94
      %p101 = scmp.eq.s32.totalorder %s23, 1
      %p102 = por %p100, %p101
      %p103 = scmp.ne.s32.totalorder %s94, %s95
      %p104 = scmp.eq.s32.totalorder %s23, 0
      %p105 = por %p103, %p104
      %p106 = scmp.ne.s32.totalorder %s94, %s95
      %p107 = scmp.eq.s32.totalorder %s24, 1
      %p108 = por %p106, %p107
      %p110 = scmp.ne.s32.totalorder %s95, %s109
      %p111 = scmp.eq.s32.totalorder %s24, 0
      %p112 = por %p110, %p111
      %s114 = sadd.s32 %s113, 1
      %p117 = scmp.eq.s32.totalorder %s18, 1
      %p118 = scmp.ne.s32.totalorder %s113, %s115
      %p119 = scmp.eq.s32.totalorder %s18, 0
      %p120 = por %p118, %p119
      %p121 = scmp.ne.s32.totalorder %s113, %s115
      %p122 = scmp.eq.s32.totalorder %s23, 1
      %p123 = por %p121, %p122
      %p124 = scmp.ne.s32.totalorder %s115, %s116
      %p125 = scmp.eq.s32.totalorder %s23, 0
      %p126 = por %p124, %p125
      %p127 = scmp.ne.s32.totalorder %s115, %s116
      %p128 = scmp.eq.s32.totalorder %s24, 1
      %p129 = por %p127, %p128
      %p131 = scmp.ne.s32.totalorder %s116, %s130
      %p132 = scmp.eq.s32.totalorder %s24, 0
      %p133 = por %p131, %p132
      %s135 = sadd.s32 %s134, 1
      %p138 = scmp.eq.s32.totalorder %s18, 1
      %p139 = scmp.ne.s32.totalorder %s134, %s136
      %p140 = scmp.eq.s32.totalorder %s18, 0
      %p141 = por %p139, %p140
      %p142 = scmp.ne.s32.totalorder %s134, %s136
      %p143 = scmp.eq.s32.totalorder %s23, 1
      %p144 = por %p142, %p143
      %p145 = scmp.ne.s32.totalorder %s136, %s137
      %p146 = scmp.eq.s32.totalorder %s23, 0
      %p147 = por %p145, %p146
      %p148 = scmp.ne.s32.totalorder %s136, %s137
      %p149 = scmp.eq.s32.totalorder %s24, 1
      %p150 = por %p148, %p149
      %p152 = scmp.ne.s32.totalorder %s137, %s151
      %p153 = scmp.eq.s32.totalorder %s24, 0
      %p154 = por %p152, %p153
      %s155 = ssub.s32 %s25, %s37
      %p156 = scmp.eq.s32.totalorder %s155, 0
      %s158 = sadd.s32 %s157, 1
      %s159 = scalar_select %p156, %s157, %s158
      %p162 = pneg %p156
      %p163 = scmp.eq.s32.totalorder %s18, 1
      %p164 = por %p162, %p163
      %p165 = scmp.ne.s32.totalorder %s157, %s160
      %p166 = scmp.eq.s32.totalorder %s18, 0
      %p167 = por %p165, %p166
      %p168 = scmp.ne.s32.totalorder %s157, %s160
      %p169 = scmp.eq.s32.totalorder %s23, 1
      %p170 = por %p168, %p169
      %p171 = scmp.ne.s32.totalorder %s160, %s161
      %p172 = scmp.eq.s32.totalorder %s23, 0
      %p173 = por %p171, %p172
      %p174 = scmp.ne.s32.totalorder %s160, %s161
      %p175 = scmp.eq.s32.totalorder %s24, 1
      %p176 = por %p174, %p175
      %p178 = scmp.ne.s32.totalorder %s161, %s177
      %p179 = scmp.eq.s32.totalorder %s24, 0
      %p180 = por %p178, %p179
      %p181 = scmp.le.s32.totalorder 1, %s18
      %p182 = scmp.lt.s32.totalorder %s18, 3
      %p183 = pnand %p181, %p182
      %p184 = pneg %p183
      // Predicated region
      $region9: #{tpu_custom_call.1} parent=5 // pred_check
        _
      $region10: #{tpu_custom_call.1} parent=5 // pred_check_branch
        %186 = sbr.rel (%p183) target = $region12
      $region11: #{tpu_custom_call.1} parent=5 // pred_region
        %s187 = ssub.s32 %s18, 1
        // Predicated region
        $region13: #{tpu_custom_call.1} parent=11 // pred_check
          %p188 = pneg %p105
        $region14: #{tpu_custom_call.1} parent=11 // pred_check_branch
          %190 = sbr.rel (%p188) target = $region16
        $region15: #{tpu_custom_call.1} parent=11 // pred_region
          _
        $region16: #{tpu_custom_call.1} parent=11 // pred_fallthru
          _
        // Predicated region
        $region17: #{tpu_custom_call.1} parent=11 // pred_check
          %p191 = pneg %p126
        $region18: #{tpu_custom_call.1} parent=11 // pred_check_branch
          %193 = sbr.rel (%p191) target = $region20
        $region19: #{tpu_custom_call.1} parent=11 // pred_region
          %s195 = ssub.s32 16384, 16384
          %196 = vsyncadd [#allocation7], %s195
          %s197 = sshll.u32 [#allocation8], 4
          %s198 = int_to_ptr.vmem [resolvable:$true] %s197
          %203 = dma.hbm_to_vmem [thread:$0]  %s3, 16384, %s198, [#allocation7], 256, 256, 16
        $region20: #{tpu_custom_call.1} parent=11 // pred_fallthru
          _
        // Predicated region
        $region21: #{tpu_custom_call.1} parent=11 // pred_check
          %p204 = pneg %p147
        $region22: #{tpu_custom_call.1} parent=11 // pred_check_branch
          %206 = sbr.rel (%p204) target = $region24
        $region23: #{tpu_custom_call.1} parent=11 // pred_region
          _
        $region24: #{tpu_custom_call.1} parent=11 // pred_fallthru
          _
      $region12: #{tpu_custom_call.1} parent=5 // pred_fallthru
        _
      %p207 = scmp.lt.s32.totalorder %s18, 2
      // Predicated region
      $region25: #{tpu_custom_call.1} parent=5 // pred_check
        %p208 = pneg %p207
      $region26: #{tpu_custom_call.1} parent=5 // pred_check_branch
        %210 = sbr.rel (%p208) target = $region28
      $region27: #{tpu_custom_call.1} parent=5 // pred_region
        // Predicated region
        $region29: #{tpu_custom_call.1} parent=27 // pred_check
          %p211 = pneg %p52
        $region30: #{tpu_custom_call.1} parent=27 // pred_check_branch
          %213 = sbr.rel (%p211) target = $region32
        $region31: #{tpu_custom_call.1} parent=27 // pred_region
          %s214 = sand.u32 %s42, 1
          %s215 = scalar_lea.sflag [#allocation4], %s214
          %s216 = sand.u32 %s42, 1
          %s217 = smul.addr %s216, 32
          %s218 = scalar_lea.vmem [#allocation3], %s217
          %s219 = smul.u32 2, %s25
          %s220 = smul.u32 4, %s26
          %s222 = ssub.s32 512, 512
          %223 = vsyncadd %s215, %s222
          %s224 = smul.addr %s219, 8
          %s225 = sadd.s32 %s220, %s224
          %s226 = smul.addr %s225, 64
          %s227 = scalar_lea.hbm %s0, %s226
          %s228 = sshll.u32 %s218, 4
          %s229 = int_to_ptr.vmem [resolvable:$true] %s228
          %234 = dma.hbm_to_vmem [thread:$0]  %s227, 512, %s229, %s215, 512, 256, 16
        $region32: #{tpu_custom_call.1} parent=27 // pred_fallthru
          _
        // Predicated region
        $region33: #{tpu_custom_call.1} parent=27 // pred_check
          %p235 = pneg %p78
        $region34: #{tpu_custom_call.1} parent=27 // pred_check_branch
          %237 = sbr.rel (%p235) target = $region36
        $region35: #{tpu_custom_call.1} parent=27 // pred_region
          %s238 = sand.u32 %s18, 1
          %s239 = scalar_lea.sflag [#allocation7], %s238
          %s240 = sand.u32 %s68, 1
          %s241 = smul.addr %s240, 1024
          %s242 = scalar_lea.vmem [#allocation6], %s241
          %s243 = smul.u32 64, %s26
          %s245 = ssub.s32 16384, 16384
          %246 = vsyncadd %s239, %s245
          %s247 = smul.addr %s243, 4
          %s248 = smul.addr %s247, 64
          %s249 = scalar_lea.hbm %s1, %s248
          %s250 = sshll.u32 %s242, 4
          %s251 = int_to_ptr.vmem [resolvable:$true] %s250
          %256 = dma.hbm_to_vmem [thread:$0]  %s249, 16384, %s251, %s239, 256, 256, 16
        $region36: #{tpu_custom_call.1} parent=27 // pred_fallthru
          _
      $region28: #{tpu_custom_call.1} parent=5 // pred_fallthru
        _
      %p257 = scmp.le.s32.totalorder 1, %s18
      %p258 = scmp.lt.s32.totalorder %s18, 3
      %p259 = pnand %p257, %p258
      %p260 = pneg %p259
      // Predicated region
      $region37: #{tpu_custom_call.1} parent=5 // pred_check
        _
      $region38: #{tpu_custom_call.1} parent=5 // pred_check_branch
        %262 = sbr.rel (%p259) target = $region40
      $region39: #{tpu_custom_call.1} parent=5 // pred_region
        %s263 = ssub.s32 %s18, 1
        %s264 = sand.u32 %s45, 1
        %s265 = scalar_lea.sflag [#allocation4], %s264
        %s266 = sand.u32 %s45, 1
        %s267 = smul.addr %s266, 32
        %s268 = scalar_lea.vmem [#allocation3], %s267
        // Predicated region
        $region41: #{tpu_custom_call.1} parent=39 // pred_check
          %p269 = pneg %p58
        $region42: #{tpu_custom_call.1} parent=39 // pred_check_branch
          %271 = sbr.rel (%p269) target = $region44
        $region43: #{tpu_custom_call.1} parent=39 // pred_region
          %272 = dma.done %s265, 512
        $region44: #{tpu_custom_call.1} parent=39 // pred_fallthru
          _
        %s273 = sand.u32 %s23, 1
        %s274 = scalar_lea.sflag [#allocation7], %s273
        %s275 = sand.u32 %s71, 1
        %s276 = smul.addr %s275, 1024
        %s277 = scalar_lea.vmem [#allocation6], %s276
        // Predicated region
        $region45: #{tpu_custom_call.1} parent=39 // pred_check
          %p278 = pneg %p84
        $region46: #{tpu_custom_call.1} parent=39 // pred_check_branch
          %280 = sbr.rel (%p278) target = $region48
        $region47: #{tpu_custom_call.1} parent=39 // pred_region
          %281 = dma.done %s274, 16384
        $region48: #{tpu_custom_call.1} parent=39 // pred_fallthru
          _
        // Predicated region
        $region49: #{tpu_custom_call.1} parent=39 // pred_check
          %p282 = pneg %p126
        $region50: #{tpu_custom_call.1} parent=39 // pred_check_branch
          %284 = sbr.rel (%p282) target = $region52
        $region51: #{tpu_custom_call.1} parent=39 // pred_region
          %285 = dma.done [#allocation7], 16384
        $region52: #{tpu_custom_call.1} parent=39 // pred_fallthru
          _
        %s286 = sand.u32 %s45, 1
        %s287 = scalar_lea.sflag [#allocation4], %s286
        %s288 = sand.u32 %s45, 1
        %s289 = smul.addr %s288, 32
        %s290 = scalar_lea.vmem [#allocation3], %s289
        %p291 = pneg %p58
        %p292 = pneg %p55
        %s293 = sand.u32 %s23, 1
        %s294 = scalar_lea.sflag [#allocation7], %s293
        %s295 = sand.u32 %s71, 1
        %s296 = smul.addr %s295, 1024
        %s297 = scalar_lea.vmem [#allocation6], %s296
        %p298 = pneg %p84
        %p299 = pneg %p81
        %p300 = pneg %p105
        %p301 = pneg %p102
        %p302 = pneg %p126
        %p303 = pneg %p123
        %p304 = pneg %p147
        %p305 = pneg %p144
        %p306 = pneg %p173
        %p307 = pneg %p170
        %s308 = smul.u32 2, %s27
        %s309 = smul.u32 4, %s28
        %s310 = smul.u32 64, %s28
        %s311 = smul.u32 2, %s27
        %p312 = scmp.eq.s32.totalorder %s28, 0
        // Predicated region
        $region53: #{tpu_custom_call.1} parent=39 // pred_check
          %p313 = pneg %p312
        $region54: #{tpu_custom_call.1} parent=39 // pred_check_branch
          %315 = sbr.rel (%p313) target = $region56
        $region55: #{tpu_custom_call.1} parent=39 // pred_region
          %316 = vst [vmem:[#allocation2] sm:$0xff] 0.0
          %317 = vst [vmem:[#allocation2 + $0x8] sm:$0xff] 0.0
          %318 = vst [vmem:[#allocation2 + $0x10] sm:$0xff] 0.0
          %319 = vst [vmem:[#allocation2 + $0x18] sm:$0xff] 0.0
          %320 = vst [vmem:[#allocation2 + $0x20] sm:$0xff] 0.0
          %321 = vst [vmem:[#allocation2 + $0x28] sm:$0xff] 0.0
          %322 = vst [vmem:[#allocation2 + $0x30] sm:$0xff] 0.0
          %323 = vst [vmem:[#allocation2 + $0x38] sm:$0xff] 0.0
        $region56: #{tpu_custom_call.1} parent=39 // pred_fallthru
          _
        %v324 = vld [vmem:[#allocation2] sm:$0xff]
        %v325 = vld [vmem:[#allocation2 + $0x8] sm:$0xff]
        %v326 = vld [vmem:[#allocation2 + $0x10] sm:$0xff]
        %v327 = vld [vmem:[#allocation2 + $0x18] sm:$0xff]
        %v328 = vld [vmem:[#allocation2 + $0x20] sm:$0xff]
        %v329 = vld [vmem:[#allocation2 + $0x28] sm:$0xff]
        %v330 = vld [vmem:[#allocation2 + $0x30] sm:$0xff]
        %v331 = vld [vmem:[#allocation2 + $0x38] sm:$0xff]
        %v332 = vld [vmem:[%s268] sm:$0xff]
        %v333 = vld [vmem:[%s268 + $0x8] sm:$0xff]
        %v334 = vld [vmem:[%s268 + $0x10] sm:$0xff]
        %v335 = vld [vmem:[%s268 + $0x18] sm:$0xff]
        %v336 = vld [vmem:[%s277] sm:$0xff]
        %v337 = vld [vmem:[%s277 + $0x8] sm:$0xff]
        %v338 = vld [vmem:[%s277 + $0x10] sm:$0xff]
        %v339 = vld [vmem:[%s277 + $0x18] sm:$0xff]
        %v340 = vld [vmem:[%s277 + $0x20] sm:$0xff]
        %v341 = vld [vmem:[%s277 + $0x28] sm:$0xff]
        %v342 = vld [vmem:[%s277 + $0x30] sm:$0xff]
        %v343 = vld [vmem:[%s277 + $0x38] sm:$0xff]
        %v344 = vld [vmem:[%s277 + $0x40] sm:$0xff]
        %v345 = vld [vmem:[%s277 + $0x48] sm:$0xff]
        %v346 = vld [vmem:[%s277 + $0x50] sm:$0xff]
        %v347 = vld [vmem:[%s277 + $0x58] sm:$0xff]
        %v348 = vld [vmem:[%s277 + $0x60] sm:$0xff]
        %v349 = vld [vmem:[%s277 + $0x68] sm:$0xff]
        %v350 = vld [vmem:[%s277 + $0x70] sm:$0xff]
        %v351 = vld [vmem:[%s277 + $0x78] sm:$0xff]
        %v352 = vld [vmem:[%s277 + $0x80] sm:$0xff]
        %v353 = vld [vmem:[%s277 + $0x88] sm:$0xff]
        %v354 = vld [vmem:[%s277 + $0x90] sm:$0xff]
        %v355 = vld [vmem:[%s277 + $0x98] sm:$0xff]
        %v356 = vld [vmem:[%s277 + $0xa0] sm:$0xff]
        %v357 = vld [vmem:[%s277 + $0xa8] sm:$0xff]
        %v358 = vld [vmem:[%s277 + $0xb0] sm:$0xff]
        %v359 = vld [vmem:[%s277 + $0xb8] sm:$0xff]
        %v360 = vld [vmem:[%s277 + $0xc0] sm:$0xff]
        %v361 = vld [vmem:[%s277 + $0xc8] sm:$0xff]
        %v362 = vld [vmem:[%s277 + $0xd0] sm:$0xff]
        %v363 = vld [vmem:[%s277 + $0xd8] sm:$0xff]
        %v364 = vld [vmem:[%s277 + $0xe0] sm:$0xff]
        %v365 = vld [vmem:[%s277 + $0xe8] sm:$0xff]
        %v366 = vld [vmem:[%s277 + $0xf0] sm:$0xff]
        %v367 = vld [vmem:[%s277 + $0xf8] sm:$0xff]
        %v368 = vld [vmem:[%s277 + $0x100] sm:$0xff]
        %v369 = vld [vmem:[%s277 + $0x108] sm:$0xff]
        %v370 = vld [vmem:[%s277 + $0x110] sm:$0xff]
        %v371 = vld [vmem:[%s277 + $0x118] sm:$0xff]
        %v372 = vld [vmem:[%s277 + $0x120] sm:$0xff]
        %v373 = vld [vmem:[%s277 + $0x128] sm:$0xff]
        %v374 = vld [vmem:[%s277 + $0x130] sm:$0xff]
        %v375 = vld [vmem:[%s277 + $0x138] sm:$0xff]
        %v376 = vld [vmem:[%s277 + $0x140] sm:$0xff]
        %v377 = vld [vmem:[%s277 + $0x148] sm:$0xff]
        %v378 = vld [vmem:[%s277 + $0x150] sm:$0xff]
        %v379 = vld [vmem:[%s277 + $0x158] sm:$0xff]
        %v380 = vld [vmem:[%s277 + $0x160] sm:$0xff]
        %v381 = vld [vmem:[%s277 + $0x168] sm:$0xff]
        %v382 = vld [vmem:[%s277 + $0x170] sm:$0xff]
        %v383 = vld [vmem:[%s277 + $0x178] sm:$0xff]
        %v384 = vld [vmem:[%s277 + $0x180] sm:$0xff]
        %v385 = vld [vmem:[%s277 + $0x188] sm:$0xff]
        %v386 = vld [vmem:[%s277 + $0x190] sm:$0xff]
        %v387 = vld [vmem:[%s277 + $0x198] sm:$0xff]
        %v388 = vld [vmem:[%s277 + $0x1a0] sm:$0xff]
        %v389 = vld [vmem:[%s277 + $0x1a8] sm:$0xff]
        %v390 = vld [vmem:[%s277 + $0x1b0] sm:$0xff]
        %v391 = vld [vmem:[%s277 + $0x1b8] sm:$0xff]
        %v392 = vld [vmem:[%s277 + $0x1c0] sm:$0xff]
        %v393 = vld [vmem:[%s277 + $0x1c8] sm:$0xff]
        %v394 = vld [vmem:[%s277 + $0x1d0] sm:$0xff]
        %v395 = vld [vmem:[%s277 + $0x1d8] sm:$0xff]
        %v396 = vld [vmem:[%s277 + $0x1e0] sm:$0xff]
        %v397 = vld [vmem:[%s277 + $0x1e8] sm:$0xff]
        %v398 = vld [vmem:[%s277 + $0x1f0] sm:$0xff]
        %v399 = vld [vmem:[%s277 + $0x1f8] sm:$0xff]
        %v400 = vld [vmem:[%s277 + $0x200] sm:$0xff]
        %v401 = vld [vmem:[%s277 + $0x208] sm:$0xff]
        %v402 = vld [vmem:[%s277 + $0x210] sm:$0xff]
        %v403 = vld [vmem:[%s277 + $0x218] sm:$0xff]
        %v404 = vld [vmem:[%s277 + $0x220] sm:$0xff]
        %v405 = vld [vmem:[%s277 + $0x228] sm:$0xff]
        %v406 = vld [vmem:[%s277 + $0x230] sm:$0xff]
        %v407 = vld [vmem:[%s277 + $0x238] sm:$0xff]
        %v408 = vld [vmem:[%s277 + $0x240] sm:$0xff]
        %v409 = vld [vmem:[%s277 + $0x248] sm:$0xff]
        %v410 = vld [vmem:[%s277 + $0x250] sm:$0xff]
        %v411 = vld [vmem:[%s277 + $0x258] sm:$0xff]
        %v412 = vld [vmem:[%s277 + $0x260] sm:$0xff]
        %v413 = vld [vmem:[%s277 + $0x268] sm:$0xff]
        %v414 = vld [vmem:[%s277 + $0x270] sm:$0xff]
        %v415 = vld [vmem:[%s277 + $0x278] sm:$0xff]
        %v416 = vld [vmem:[%s277 + $0x280] sm:$0xff]
        %v417 = vld [vmem:[%s277 + $0x288] sm:$0xff]
        %v418 = vld [vmem:[%s277 + $0x290] sm:$0xff]
        %v419 = vld [vmem:[%s277 + $0x298] sm:$0xff]
        %v420 = vld [vmem:[%s277 + $0x2a0] sm:$0xff]
        %v421 = vld [vmem:[%s277 + $0x2a8] sm:$0xff]
        %v422 = vld [vmem:[%s277 + $0x2b0] sm:$0xff]
        %v423 = vld [vmem:[%s277 + $0x2b8] sm:$0xff]
        %v424 = vld [vmem:[%s277 + $0x2c0] sm:$0xff]
        %v425 = vld [vmem:[%s277 + $0x2c8] sm:$0xff]
        %v426 = vld [vmem:[%s277 + $0x2d0] sm:$0xff]
        %v427 = vld [vmem:[%s277 + $0x2d8] sm:$0xff]
        %v428 = vld [vmem:[%s277 + $0x2e0] sm:$0xff]
        %v429 = vld [vmem:[%s277 + $0x2e8] sm:$0xff]
        %v430 = vld [vmem:[%s277 + $0x2f0] sm:$0xff]
        %v431 = vld [vmem:[%s277 + $0x2f8] sm:$0xff]
        %v432 = vld [vmem:[%s277 + $0x300] sm:$0xff]
        %v433 = vld [vmem:[%s277 + $0x308] sm:$0xff]
        %v434 = vld [vmem:[%s277 + $0x310] sm:$0xff]
        %v435 = vld [vmem:[%s277 + $0x318] sm:$0xff]
        %v436 = vld [vmem:[%s277 + $0x320] sm:$0xff]
        %v437 = vld [vmem:[%s277 + $0x328] sm:$0xff]
        %v438 = vld [vmem:[%s277 + $0x330] sm:$0xff]
        %v439 = vld [vmem:[%s277 + $0x338] sm:$0xff]
        %v440 = vld [vmem:[%s277 + $0x340] sm:$0xff]
        %v441 = vld [vmem:[%s277 + $0x348] sm:$0xff]
        %v442 = vld [vmem:[%s277 + $0x350] sm:$0xff]
        %v443 = vld [vmem:[%s277 + $0x358] sm:$0xff]
        %v444 = vld [vmem:[%s277 + $0x360] sm:$0xff]
        %v445 = vld [vmem:[%s277 + $0x368] sm:$0xff]
        %v446 = vld [vmem:[%s277 + $0x370] sm:$0xff]
        %v447 = vld [vmem:[%s277 + $0x378] sm:$0xff]
        %v448 = vld [vmem:[%s277 + $0x380] sm:$0xff]
        %v449 = vld [vmem:[%s277 + $0x388] sm:$0xff]
        %v450 = vld [vmem:[%s277 + $0x390] sm:$0xff]
        %v451 = vld [vmem:[%s277 + $0x398] sm:$0xff]
        %v452 = vld [vmem:[%s277 + $0x3a0] sm:$0xff]
        %v453 = vld [vmem:[%s277 + $0x3a8] sm:$0xff]
        %v454 = vld [vmem:[%s277 + $0x3b0] sm:$0xff]
        %v455 = vld [vmem:[%s277 + $0x3b8] sm:$0xff]
        %v456 = vld [vmem:[%s277 + $0x3c0] sm:$0xff]
        %v457 = vld [vmem:[%s277 + $0x3c8] sm:$0xff]
        %v458 = vld [vmem:[%s277 + $0x3d0] sm:$0xff]
        %v459 = vld [vmem:[%s277 + $0x3d8] sm:$0xff]
        %v460 = vld [vmem:[%s277 + $0x3e0] sm:$0xff]
        %v461 = vld [vmem:[%s277 + $0x3e8] sm:$0xff]
        %v462 = vld [vmem:[%s277 + $0x3f0] sm:$0xff]
        %v463 = vld [vmem:[%s277 + $0x3f8] sm:$0xff]
        %v468 = vunpack.c.l.b16 %v332
        %v469 = vunpack.c.h.b16 %v332
        %v470 = vunpack.c.l.b16 %v333
        %v471 = vunpack.c.h.b16 %v333
        %v472 = vunpack.c.l.b16 %v334
        %v473 = vunpack.c.h.b16 %v334
        %v474 = vunpack.c.l.b16 %v335
        %v475 = vunpack.c.h.b16 %v335
        %v476 = vpack.c.b16 %v472, %v468
        %v477 = vpack.c.b16 %v473, %v469
        %v478 = vpack.c.b16 %v474, %v470
        %v479 = vpack.c.b16 %v475, %v471
        %v612 = vunpack.c.l.b16 %v336
        %v613 = vunpack.c.h.b16 %v336
        %v614 = vunpack.c.l.b16 %v337
        %v615 = vunpack.c.h.b16 %v337
        %v616 = vunpack.c.l.b16 %v338
        %v617 = vunpack.c.h.b16 %v338
        %v618 = vunpack.c.l.b16 %v339
        %v619 = vunpack.c.h.b16 %v339
        %v620 = vunpack.c.l.b16 %v340
        %v621 = vunpack.c.h.b16 %v340
        %v622 = vunpack.c.l.b16 %v341
        %v623 = vunpack.c.h.b16 %v341
        %v624 = vunpack.c.l.b16 %v342
        %v625 = vunpack.c.h.b16 %v342
        %v626 = vunpack.c.l.b16 %v343
        %v627 = vunpack.c.h.b16 %v343
        %v628 = vunpack.c.l.b16 %v344
        %v629 = vunpack.c.h.b16 %v344
        %v630 = vunpack.c.l.b16 %v345
        %v631 = vunpack.c.h.b16 %v345
        %v632 = vunpack.c.l.b16 %v346
        %v633 = vunpack.c.h.b16 %v346
        %v634 = vunpack.c.l.b16 %v347
        %v635 = vunpack.c.h.b16 %v347
        %v636 = vunpack.c.l.b16 %v348
        %v637 = vunpack.c.h.b16 %v348
        %v638 = vunpack.c.l.b16 %v349
        %v639 = vunpack.c.h.b16 %v349
        %v640 = vunpack.c.l.b16 %v350
        %v641 = vunpack.c.h.b16 %v350
        %v642 = vunpack.c.l.b16 %v351
        %v643 = vunpack.c.h.b16 %v351
        %v644 = vunpack.c.l.b16 %v352
        %v645 = vunpack.c.h.b16 %v352
        %v646 = vunpack.c.l.b16 %v353
        %v647 = vunpack.c.h.b16 %v353
        %v648 = vunpack.c.l.b16 %v354
        %v649 = vunpack.c.h.b16 %v354
        %v650 = vunpack.c.l.b16 %v355
        %v651 = vunpack.c.h.b16 %v355
        %v652 = vunpack.c.l.b16 %v356
        %v653 = vunpack.c.h.b16 %v356
        %v654 = vunpack.c.l.b16 %v357
        %v655 = vunpack.c.h.b16 %v357
        %v656 = vunpack.c.l.b16 %v358
        %v657 = vunpack.c.h.b16 %v358
        %v658 = vunpack.c.l.b16 %v359
        %v659 = vunpack.c.h.b16 %v359
        %v660 = vunpack.c.l.b16 %v360
        %v661 = vunpack.c.h.b16 %v360
        %v662 = vunpack.c.l.b16 %v361
        %v663 = vunpack.c.h.b16 %v361
        %v664 = vunpack.c.l.b16 %v362
        %v665 = vunpack.c.h.b16 %v362
        %v666 = vunpack.c.l.b16 %v363
        %v667 = vunpack.c.h.b16 %v363
        %v668 = vunpack.c.l.b16 %v364
        %v669 = vunpack.c.h.b16 %v364
        %v670 = vunpack.c.l.b16 %v365
        %v671 = vunpack.c.h.b16 %v365
        %v672 = vunpack.c.l.b16 %v366
        %v673 = vunpack.c.h.b16 %v366
        %v674 = vunpack.c.l.b16 %v367
        %v675 = vunpack.c.h.b16 %v367
        %v676 = vunpack.c.l.b16 %v368
        %v677 = vunpack.c.h.b16 %v368
        %v678 = vunpack.c.l.b16 %v369
        %v679 = vunpack.c.h.b16 %v369
        %v680 = vunpack.c.l.b16 %v370
        %v681 = vunpack.c.h.b16 %v370
        %v682 = vunpack.c.l.b16 %v371
        %v683 = vunpack.c.h.b16 %v371
        %v684 = vunpack.c.l.b16 %v372
        %v685 = vunpack.c.h.b16 %v372
        %v686 = vunpack.c.l.b16 %v373
        %v687 = vunpack.c.h.b16 %v373
        %v688 = vunpack.c.l.b16 %v374
        %v689 = vunpack.c.h.b16 %v374
        %v690 = vunpack.c.l.b16 %v375
        %v691 = vunpack.c.h.b16 %v375
        %v692 = vunpack.c.l.b16 %v376
        %v693 = vunpack.c.h.b16 %v376
        %v694 = vunpack.c.l.b16 %v377
        %v695 = vunpack.c.h.b16 %v377
        %v696 = vunpack.c.l.b16 %v378
        %v697 = vunpack.c.h.b16 %v378
        %v698 = vunpack.c.l.b16 %v379
        %v699 = vunpack.c.h.b16 %v379
        %v700 = vunpack.c.l.b16 %v380
        %v701 = vunpack.c.h.b16 %v380
        %v702 = vunpack.c.l.b16 %v381
        %v703 = vunpack.c.h.b16 %v381
        %v704 = vunpack.c.l.b16 %v382
        %v705 = vunpack.c.h.b16 %v382
        %v706 = vunpack.c.l.b16 %v383
        %v707 = vunpack.c.h.b16 %v383
        %v708 = vunpack.c.l.b16 %v384
        %v709 = vunpack.c.h.b16 %v384
        %v710 = vunpack.c.l.b16 %v385
        %v711 = vunpack.c.h.b16 %v385
        %v712 = vunpack.c.l.b16 %v386
        %v713 = vunpack.c.h.b16 %v386
        %v714 = vunpack.c.l.b16 %v387
        %v715 = vunpack.c.h.b16 %v387
        %v716 = vunpack.c.l.b16 %v388
        %v717 = vunpack.c.h.b16 %v388
        %v718 = vunpack.c.l.b16 %v389
        %v719 = vunpack.c.h.b16 %v389
        %v720 = vunpack.c.l.b16 %v390
        %v721 = vunpack.c.h.b16 %v390
        %v722 = vunpack.c.l.b16 %v391
        %v723 = vunpack.c.h.b16 %v391
        %v724 = vunpack.c.l.b16 %v392
        %v725 = vunpack.c.h.b16 %v392
        %v726 = vunpack.c.l.b16 %v393
        %v727 = vunpack.c.h.b16 %v393
        %v728 = vunpack.c.l.b16 %v394
        %v729 = vunpack.c.h.b16 %v394
        %v730 = vunpack.c.l.b16 %v395
        %v731 = vunpack.c.h.b16 %v395
        %v732 = vunpack.c.l.b16 %v396
        %v733 = vunpack.c.h.b16 %v396
        %v734 = vunpack.c.l.b16 %v397
        %v735 = vunpack.c.h.b16 %v397
        %v736 = vunpack.c.l.b16 %v398
        %v737 = vunpack.c.h.b16 %v398
        %v738 = vunpack.c.l.b16 %v399
        %v739 = vunpack.c.h.b16 %v399
        %v740 = vunpack.c.l.b16 %v400
        %v741 = vunpack.c.h.b16 %v400
        %v742 = vunpack.c.l.b16 %v401
        %v743 = vunpack.c.h.b16 %v401
        %v744 = vunpack.c.l.b16 %v402
        %v745 = vunpack.c.h.b16 %v402
        %v746 = vunpack.c.l.b16 %v403
        %v747 = vunpack.c.h.b16 %v403
        %v748 = vunpack.c.l.b16 %v404
        %v749 = vunpack.c.h.b16 %v404
        %v750 = vunpack.c.l.b16 %v405
        %v751 = vunpack.c.h.b16 %v405
        %v752 = vunpack.c.l.b16 %v406
        %v753 = vunpack.c.h.b16 %v406
        %v754 = vunpack.c.l.b16 %v407
        %v755 = vunpack.c.h.b16 %v407
        %v756 = vunpack.c.l.b16 %v408
        %v757 = vunpack.c.h.b16 %v408
        %v758 = vunpack.c.l.b16 %v409
        %v759 = vunpack.c.h.b16 %v409
        %v760 = vunpack.c.l.b16 %v410
        %v761 = vunpack.c.h.b16 %v410
        %v762 = vunpack.c.l.b16 %v411
        %v763 = vunpack.c.h.b16 %v411
        %v764 = vunpack.c.l.b16 %v412
        %v765 = vunpack.c.h.b16 %v412
        %v766 = vunpack.c.l.b16 %v413
        %v767 = vunpack.c.h.b16 %v413
        %v768 = vunpack.c.l.b16 %v414
        %v769 = vunpack.c.h.b16 %v414
        %v770 = vunpack.c.l.b16 %v415
        %v771 = vunpack.c.h.b16 %v415
        %v772 = vunpack.c.l.b16 %v416
        %v773 = vunpack.c.h.b16 %v416
        %v774 = vunpack.c.l.b16 %v417
        %v775 = vunpack.c.h.b16 %v417
        %v776 = vunpack.c.l.b16 %v418
        %v777 = vunpack.c.h.b16 %v418
        %v778 = vunpack.c.l.b16 %v419
        %v779 = vunpack.c.h.b16 %v419
        %v780 = vunpack.c.l.b16 %v420
        %v781 = vunpack.c.h.b16 %v420
        %v782 = vunpack.c.l.b16 %v421
        %v783 = vunpack.c.h.b16 %v421
        %v784 = vunpack.c.l.b16 %v422
        %v785 = vunpack.c.h.b16 %v422
        %v786 = vunpack.c.l.b16 %v423
        %v787 = vunpack.c.h.b16 %v423
        %v788 = vunpack.c.l.b16 %v424
        %v789 = vunpack.c.h.b16 %v424
        %v790 = vunpack.c.l.b16 %v425
        %v791 = vunpack.c.h.b16 %v425
        %v792 = vunpack.c.l.b16 %v426
        %v793 = vunpack.c.h.b16 %v426
        %v794 = vunpack.c.l.b16 %v427
        %v795 = vunpack.c.h.b16 %v427
        %v796 = vunpack.c.l.b16 %v428
        %v797 = vunpack.c.h.b16 %v428
        %v798 = vunpack.c.l.b16 %v429
        %v799 = vunpack.c.h.b16 %v429
        %v800 = vunpack.c.l.b16 %v430
        %v801 = vunpack.c.h.b16 %v430
        %v802 = vunpack.c.l.b16 %v431
        %v803 = vunpack.c.h.b16 %v431
        %v804 = vunpack.c.l.b16 %v432
        %v805 = vunpack.c.h.b16 %v432
        %v806 = vunpack.c.l.b16 %v433
        %v807 = vunpack.c.h.b16 %v433
        %v808 = vunpack.c.l.b16 %v434
        %v809 = vunpack.c.h.b16 %v434
        %v810 = vunpack.c.l.b16 %v435
        %v811 = vunpack.c.h.b16 %v435
        %v812 = vunpack.c.l.b16 %v436
        %v813 = vunpack.c.h.b16 %v436
        %v814 = vunpack.c.l.b16 %v437
        %v815 = vunpack.c.h.b16 %v437
        %v816 = vunpack.c.l.b16 %v438
        %v817 = vunpack.c.h.b16 %v438
        %v818 = vunpack.c.l.b16 %v439
        %v819 = vunpack.c.h.b16 %v439
        %v820 = vunpack.c.l.b16 %v440
        %v821 = vunpack.c.h.b16 %v440
        %v822 = vunpack.c.l.b16 %v441
        %v823 = vunpack.c.h.b16 %v441
        %v824 = vunpack.c.l.b16 %v442
        %v825 = vunpack.c.h.b16 %v442
        %v826 = vunpack.c.l.b16 %v443
        %v827 = vunpack.c.h.b16 %v443
        %v828 = vunpack.c.l.b16 %v444
        %v829 = vunpack.c.h.b16 %v444
        %v830 = vunpack.c.l.b16 %v445
        %v831 = vunpack.c.h.b16 %v445
        %v832 = vunpack.c.l.b16 %v446
        %v833 = vunpack.c.h.b16 %v446
        %v834 = vunpack.c.l.b16 %v447
        %v835 = vunpack.c.h.b16 %v447
        %v836 = vunpack.c.l.b16 %v448
        %v837 = vunpack.c.h.b16 %v448
        %v838 = vunpack.c.l.b16 %v449
        %v839 = vunpack.c.h.b16 %v449
        %v840 = vunpack.c.l.b16 %v450
        %v841 = vunpack.c.h.b16 %v450
        %v842 = vunpack.c.l.b16 %v451
        %v843 = vunpack.c.h.b16 %v451
        %v844 = vunpack.c.l.b16 %v452
        %v845 = vunpack.c.h.b16 %v452
        %v846 = vunpack.c.l.b16 %v453
        %v847 = vunpack.c.h.b16 %v453
        %v848 = vunpack.c.l.b16 %v454
        %v849 = vunpack.c.h.b16 %v454
        %v850 = vunpack.c.l.b16 %v455
        %v851 = vunpack.c.h.b16 %v455
        %v852 = vunpack.c.l.b16 %v456
        %v853 = vunpack.c.h.b16 %v456
        %v854 = vunpack.c.l.b16 %v457
        %v855 = vunpack.c.h.b16 %v457
        %v856 = vunpack.c.l.b16 %v458
        %v857 = vunpack.c.h.b16 %v458
        %v858 = vunpack.c.l.b16 %v459
        %v859 = vunpack.c.h.b16 %v459
        %v860 = vunpack.c.l.b16 %v460
        %v861 = vunpack.c.h.b16 %v460
        %v862 = vunpack.c.l.b16 %v461
        %v863 = vunpack.c.h.b16 %v461
        %v864 = vunpack.c.l.b16 %v462
        %v865 = vunpack.c.h.b16 %v462
        %v866 = vunpack.c.l.b16 %v463
        %v867 = vunpack.c.h.b16 %v463
        %v868 = vpack.c.b16 %v616, %v612
        %v869 = vpack.c.b16 %v617, %v613
        %v870 = vpack.c.b16 %v618, %v614
        %v871 = vpack.c.b16 %v619, %v615
        %v872 = vpack.c.b16 %v624, %v620
        %v873 = vpack.c.b16 %v625, %v621
        %v874 = vpack.c.b16 %v626, %v622
        %v875 = vpack.c.b16 %v627, %v623
        %v876 = vpack.c.b16 %v632, %v628
        %v877 = vpack.c.b16 %v633, %v629
        %v878 = vpack.c.b16 %v634, %v630
        %v879 = vpack.c.b16 %v635, %v631
        %v880 = vpack.c.b16 %v640, %v636
        %v881 = vpack.c.b16 %v641, %v637
        %v882 = vpack.c.b16 %v642, %v638
        %v883 = vpack.c.b16 %v643, %v639
        %v884 = vpack.c.b16 %v648, %v644
        %v885 = vpack.c.b16 %v649, %v645
        %v886 = vpack.c.b16 %v650, %v646
        %v887 = vpack.c.b16 %v651, %v647
        %v888 = vpack.c.b16 %v656, %v652
        %v889 = vpack.c.b16 %v657, %v653
        %v890 = vpack.c.b16 %v658, %v654
        %v891 = vpack.c.b16 %v659, %v655
        %v892 = vpack.c.b16 %v664, %v660
        %v893 = vpack.c.b16 %v665, %v661
        %v894 = vpack.c.b16 %v666, %v662
        %v895 = vpack.c.b16 %v667, %v663
        %v896 = vpack.c.b16 %v672, %v668
        %v897 = vpack.c.b16 %v673, %v669
        %v898 = vpack.c.b16 %v674, %v670
        %v899 = vpack.c.b16 %v675, %v671
        %v900 = vpack.c.b16 %v680, %v676
        %v901 = vpack.c.b16 %v681, %v677
        %v902 = vpack.c.b16 %v682, %v678
        %v903 = vpack.c.b16 %v683, %v679
        %v904 = vpack.c.b16 %v688, %v684
        %v905 = vpack.c.b16 %v689, %v685
        %v906 = vpack.c.b16 %v690, %v686
        %v907 = vpack.c.b16 %v691, %v687
        %v908 = vpack.c.b16 %v696, %v692
        %v909 = vpack.c.b16 %v697, %v693
        %v910 = vpack.c.b16 %v698, %v694
        %v911 = vpack.c.b16 %v699, %v695
        %v912 = vpack.c.b16 %v704, %v700
        %v913 = vpack.c.b16 %v705, %v701
        %v914 = vpack.c.b16 %v706, %v702
        %v915 = vpack.c.b16 %v707, %v703
        %v916 = vpack.c.b16 %v712, %v708
        %v917 = vpack.c.b16 %v713, %v709
        %v918 = vpack.c.b16 %v714, %v710
        %v919 = vpack.c.b16 %v715, %v711
        %v920 = vpack.c.b16 %v720, %v716
        %v921 = vpack.c.b16 %v721, %v717
        %v922 = vpack.c.b16 %v722, %v718
        %v923 = vpack.c.b16 %v723, %v719
        %v924 = vpack.c.b16 %v728, %v724
        %v925 = vpack.c.b16 %v729, %v725
        %v926 = vpack.c.b16 %v730, %v726
        %v927 = vpack.c.b16 %v731, %v727
        %v928 = vpack.c.b16 %v736, %v732
        %v929 = vpack.c.b16 %v737, %v733
        %v930 = vpack.c.b16 %v738, %v734
        %v931 = vpack.c.b16 %v739, %v735
        %v932 = vpack.c.b16 %v744, %v740
        %v933 = vpack.c.b16 %v745, %v741
        %v934 = vpack.c.b16 %v746, %v742
        %v935 = vpack.c.b16 %v747, %v743
        %v936 = vpack.c.b16 %v752, %v748
        %v937 = vpack.c.b16 %v753, %v749
        %v938 = vpack.c.b16 %v754, %v750
        %v939 = vpack.c.b16 %v755, %v751
        %v940 = vpack.c.b16 %v760, %v756
        %v941 = vpack.c.b16 %v761, %v757
        %v942 = vpack.c.b16 %v762, %v758
        %v943 = vpack.c.b16 %v763, %v759
        %v944 = vpack.c.b16 %v768, %v764
        %v945 = vpack.c.b16 %v769, %v765
        %v946 = vpack.c.b16 %v770, %v766
        %v947 = vpack.c.b16 %v771, %v767
        %v948 = vpack.c.b16 %v776, %v772
        %v949 = vpack.c.b16 %v777, %v773
        %v950 = vpack.c.b16 %v778, %v774
        %v951 = vpack.c.b16 %v779, %v775
        %v952 = vpack.c.b16 %v784, %v780
        %v953 = vpack.c.b16 %v785, %v781
        %v954 = vpack.c.b16 %v786, %v782
        %v955 = vpack.c.b16 %v787, %v783
        %v956 = vpack.c.b16 %v792, %v788
        %v957 = vpack.c.b16 %v793, %v789
        %v958 = vpack.c.b16 %v794, %v790
        %v959 = vpack.c.b16 %v795, %v791
        %v960 = vpack.c.b16 %v800, %v796
        %v961 = vpack.c.b16 %v801, %v797
        %v962 = vpack.c.b16 %v802, %v798
        %v963 = vpack.c.b16 %v803, %v799
        %v964 = vpack.c.b16 %v808, %v804
        %v965 = vpack.c.b16 %v809, %v805
        %v966 = vpack.c.b16 %v810, %v806
        %v967 = vpack.c.b16 %v811, %v807
        %v968 = vpack.c.b16 %v816, %v812
        %v969 = vpack.c.b16 %v817, %v813
        %v970 = vpack.c.b16 %v818, %v814
        %v971 = vpack.c.b16 %v819, %v815
        %v972 = vpack.c.b16 %v824, %v820
        %v973 = vpack.c.b16 %v825, %v821
        %v974 = vpack.c.b16 %v826, %v822
        %v975 = vpack.c.b16 %v827, %v823
        %v976 = vpack.c.b16 %v832, %v828
        %v977 = vpack.c.b16 %v833, %v829
        %v978 = vpack.c.b16 %v834, %v830
        %v979 = vpack.c.b16 %v835, %v831
        %v980 = vpack.c.b16 %v840, %v836
        %v981 = vpack.c.b16 %v841, %v837
        %v982 = vpack.c.b16 %v842, %v838
        %v983 = vpack.c.b16 %v843, %v839
        %v984 = vpack.c.b16 %v848, %v844
        %v985 = vpack.c.b16 %v849, %v845
        %v986 = vpack.c.b16 %v850, %v846
        %v987 = vpack.c.b16 %v851, %v847
        %v988 = vpack.c.b16 %v856, %v852
        %v989 = vpack.c.b16 %v857, %v853
        %v990 = vpack.c.b16 %v858, %v854
        %v991 = vpack.c.b16 %v859, %v855
        %v992 = vpack.c.b16 %v864, %v860
        %v993 = vpack.c.b16 %v865, %v861
        %v994 = vpack.c.b16 %v866, %v862
        %v995 = vpack.c.b16 %v867, %v863
        %1124 = vmatprep.subr.bf16.mxu0 %v869
        %1125 = vmatpush1.bf16.msra.mxu0 %v868
        %1126 = vmatprep.subr.bf16.mxu0 %v873
        %1127 = vmatpush1.bf16.msra.mxu0 %v872
        %1128 = vmatprep.subr.bf16.mxu0 %v877
        %1129 = vmatpush1.bf16.msra.mxu0 %v876
        %1130 = vmatprep.subr.bf16.mxu0 %v881
        %1131 = vmatpush1.bf16.msra.mxu0 %v880
        %1132 = vmatprep.subr.bf16.mxu0 %v885
        %1133 = vmatpush1.bf16.msra.mxu0 %v884
        %1134 = vmatprep.subr.bf16.mxu0 %v889
        %1135 = vmatpush1.bf16.msra.mxu0 %v888
        %1136 = vmatprep.subr.bf16.mxu0 %v893
        %1137 = vmatpush1.bf16.msra.mxu0 %v892
        %1138 = vmatprep.subr.bf16.mxu0 %v897
        %1139 = vmatpush1.bf16.msra.mxu0 %v896
        %1140 = vmatprep.subr.bf16.mxu0 %v901
        %1141 = vmatpush1.bf16.msra.mxu0 %v900
        %1142 = vmatprep.subr.bf16.mxu0 %v905
        %1143 = vmatpush1.bf16.msra.mxu0 %v904
        %1144 = vmatprep.subr.bf16.mxu0 %v909
        %1145 = vmatpush1.bf16.msra.mxu0 %v908
        %1146 = vmatprep.subr.bf16.mxu0 %v913
        %1147 = vmatpush1.bf16.msra.mxu0 %v912
        %1148 = vmatprep.subr.bf16.mxu0 %v917
        %1149 = vmatpush1.bf16.msra.mxu0 %v916
        %1150 = vmatprep.subr.bf16.mxu0 %v921
        %1151 = vmatpush1.bf16.msra.mxu0 %v920
        %1152 = vmatprep.subr.bf16.mxu0 %v925
        %1153 = vmatpush1.bf16.msra.mxu0 %v924
        %1154 = vmatprep.subr.bf16.mxu0 %v929
        %1155 = vmatpush1.bf16.msra.mxu0 %v928
        %1156 = vmatprep.mubr.bf16.mxu0 %v477
        %1157 = vmatmul.mubr.bf16.gmra.mrb[0].mxu0 %v476
        %v1158 = vpop.f32.mrb[0].mxu0
        %v1159 = vadd.f32 0.0, %v1158
        %v1160 = vpop.f32.mrb[0].mxu0
        %v1161 = vadd.f32 0.0, %v1160
        %v1162 = vpop.f32.mrb[0].mxu0
        %v1163 = vadd.f32 0.0, %v1162
        %v1164 = vpop.f32.mrb[0].mxu0
        %v1165 = vadd.f32 0.0, %v1164
        %1166 = vdwg.mxu0
        %1167 = vmatprep.subr.bf16.mxu0 %v933
        %1168 = vmatpush1.bf16.msra.mxu0 %v932
        %1169 = vmatprep.subr.bf16.mxu0 %v937
        %1170 = vmatpush1.bf16.msra.mxu0 %v936
        %1171 = vmatprep.subr.bf16.mxu0 %v941
        %1172 = vmatpush1.bf16.msra.mxu0 %v940
        %1173 = vmatprep.subr.bf16.mxu0 %v945
        %1174 = vmatpush1.bf16.msra.mxu0 %v944
        %1175 = vmatprep.subr.bf16.mxu0 %v949
        %1176 = vmatpush1.bf16.msra.mxu0 %v948
        %1177 = vmatprep.subr.bf16.mxu0 %v953
        %1178 = vmatpush1.bf16.msra.mxu0 %v952
        %1179 = vmatprep.subr.bf16.mxu0 %v957
        %1180 = vmatpush1.bf16.msra.mxu0 %v956
        %1181 = vmatprep.subr.bf16.mxu0 %v961
        %1182 = vmatpush1.bf16.msra.mxu0 %v960
        %1183 = vmatprep.subr.bf16.mxu0 %v965
        %1184 = vmatpush1.bf16.msra.mxu0 %v964
        %1185 = vmatprep.subr.bf16.mxu0 %v969
        %1186 = vmatpush1.bf16.msra.mxu0 %v968
        %1187 = vmatprep.subr.bf16.mxu0 %v973
        %1188 = vmatpush1.bf16.msra.mxu0 %v972
        %1189 = vmatprep.subr.bf16.mxu0 %v977
        %1190 = vmatpush1.bf16.msra.mxu0 %v976
        %1191 = vmatprep.subr.bf16.mxu0 %v981
        %1192 = vmatpush1.bf16.msra.mxu0 %v980
        %1193 = vmatprep.subr.bf16.mxu0 %v985
        %1194 = vmatpush1.bf16.msra.mxu0 %v984
        %1195 = vmatprep.subr.bf16.mxu0 %v989
        %1196 = vmatpush1.bf16.msra.mxu0 %v988
        %1197 = vmatprep.subr.bf16.mxu0 %v993
        %1198 = vmatpush1.bf16.msra.mxu0 %v992
        %1199 = vmatprep.mubr.bf16.mxu0 %v479
        %1200 = vmatmul.mubr.bf16.gmra.mrb[0].mxu0 %v478
        %v1201 = vpop.f32.mrb[0].mxu0
        %v1202 = vadd.f32 %v1159, %v1201
        %v1203 = vpop.f32.mrb[0].mxu0
        %v1204 = vadd.f32 %v1161, %v1203
        %v1205 = vpop.f32.mrb[0].mxu0
        %v1206 = vadd.f32 %v1163, %v1205
        %v1207 = vpop.f32.mrb[0].mxu0
        %v1208 = vadd.f32 %v1165, %v1207
        %1209 = vdwg.mxu0
        %1210 = vmatprep.subr.bf16.mxu0 %v871
        %1211 = vmatpush1.bf16.msra.mxu0 %v870
        %1212 = vmatprep.subr.bf16.mxu0 %v875
        %1213 = vmatpush1.bf16.msra.mxu0 %v874
        %1214 = vmatprep.subr.bf16.mxu0 %v879
        %1215 = vmatpush1.bf16.msra.mxu0 %v878
        %1216 = vmatprep.subr.bf16.mxu0 %v883
        %1217 = vmatpush1.bf16.msra.mxu0 %v882
        %1218 = vmatprep.subr.bf16.mxu0 %v887
        %1219 = vmatpush1.bf16.msra.mxu0 %v886
        %1220 = vmatprep.subr.bf16.mxu0 %v891
        %1221 = vmatpush1.bf16.msra.mxu0 %v890
        %1222 = vmatprep.subr.bf16.mxu0 %v895
        %1223 = vmatpush1.bf16.msra.mxu0 %v894
        %1224 = vmatprep.subr.bf16.mxu0 %v899
        %1225 = vmatpush1.bf16.msra.mxu0 %v898
        %1226 = vmatprep.subr.bf16.mxu0 %v903
        %1227 = vmatpush1.bf16.msra.mxu0 %v902
        %1228 = vmatprep.subr.bf16.mxu0 %v907
        %1229 = vmatpush1.bf16.msra.mxu0 %v906
        %1230 = vmatprep.subr.bf16.mxu0 %v911
        %1231 = vmatpush1.bf16.msra.mxu0 %v910
        %1232 = vmatprep.subr.bf16.mxu0 %v915
        %1233 = vmatpush1.bf16.msra.mxu0 %v914
        %1234 = vmatprep.subr.bf16.mxu0 %v919
        %1235 = vmatpush1.bf16.msra.mxu0 %v918
        %1236 = vmatprep.subr.bf16.mxu0 %v923
        %1237 = vmatpush1.bf16.msra.mxu0 %v922
        %1238 = vmatprep.subr.bf16.mxu0 %v927
        %1239 = vmatpush1.bf16.msra.mxu0 %v926
        %1240 = vmatprep.subr.bf16.mxu0 %v931
        %1241 = vmatpush1.bf16.msra.mxu0 %v930
        %1242 = vmatprep.mubr.bf16.mxu0 %v477
        %1243 = vmatmul.mubr.bf16.gmra.mrb[0].mxu0 %v476
        %v1244 = vpop.f32.mrb[0].mxu0
        %v1245 = vadd.f32 0.0, %v1244
        %v1246 = vpop.f32.mrb[0].mxu0
        %v1247 = vadd.f32 0.0, %v1246
        %v1248 = vpop.f32.mrb[0].mxu0
        %v1249 = vadd.f32 0.0, %v1248
        %v1250 = vpop.f32.mrb[0].mxu0
        %v1251 = vadd.f32 0.0, %v1250
        %1252 = vdwg.mxu0
        %1253 = vmatprep.subr.bf16.mxu0 %v935
        %1254 = vmatpush1.bf16.msra.mxu0 %v934
        %1255 = vmatprep.subr.bf16.mxu0 %v939
        %1256 = vmatpush1.bf16.msra.mxu0 %v938
        %1257 = vmatprep.subr.bf16.mxu0 %v943
        %1258 = vmatpush1.bf16.msra.mxu0 %v942
        %1259 = vmatprep.subr.bf16.mxu0 %v947
        %1260 = vmatpush1.bf16.msra.mxu0 %v946
        %1261 = vmatprep.subr.bf16.mxu0 %v951
        %1262 = vmatpush1.bf16.msra.mxu0 %v950
        %1263 = vmatprep.subr.bf16.mxu0 %v955
        %1264 = vmatpush1.bf16.msra.mxu0 %v954
        %1265 = vmatprep.subr.bf16.mxu0 %v959
        %1266 = vmatpush1.bf16.msra.mxu0 %v958
        %1267 = vmatprep.subr.bf16.mxu0 %v963
        %1268 = vmatpush1.bf16.msra.mxu0 %v962
        %1269 = vmatprep.subr.bf16.mxu0 %v967
        %1270 = vmatpush1.bf16.msra.mxu0 %v966
        %1271 = vmatprep.subr.bf16.mxu0 %v971
        %1272 = vmatpush1.bf16.msra.mxu0 %v970
        %1273 = vmatprep.subr.bf16.mxu0 %v975
        %1274 = vmatpush1.bf16.msra.mxu0 %v974
        %1275 = vmatprep.subr.bf16.mxu0 %v979
        %1276 = vmatpush1.bf16.msra.mxu0 %v978
        %1277 = vmatprep.subr.bf16.mxu0 %v983
        %1278 = vmatpush1.bf16.msra.mxu0 %v982
        %1279 = vmatprep.subr.bf16.mxu0 %v987
        %1280 = vmatpush1.bf16.msra.mxu0 %v986
        %1281 = vmatprep.subr.bf16.mxu0 %v991
        %1282 = vmatpush1.bf16.msra.mxu0 %v990
        %1283 = vmatprep.subr.bf16.mxu0 %v995
        %1284 = vmatpush1.bf16.msra.mxu0 %v994
        %1285 = vmatprep.mubr.bf16.mxu0 %v479
        %1286 = vmatmul.mubr.bf16.gmra.mrb[0].mxu0 %v478
        %v1287 = vpop.f32.mrb[0].mxu0
        %v1288 = vadd.f32 %v1245, %v1287
        %v1289 = vpop.f32.mrb[0].mxu0
        %v1290 = vadd.f32 %v1247, %v1289
        %v1291 = vpop.f32.mrb[0].mxu0
        %v1292 = vadd.f32 %v1249, %v1291
        %v1293 = vpop.f32.mrb[0].mxu0
        %v1294 = vadd.f32 %v1251, %v1293
        %1295 = vdwg.mxu0
        %v1296 = vadd.f32 %v324, %v1202
        %v1297 = vadd.f32 %v325, %v1204
        %v1298 = vadd.f32 %v326, %v1288
        %v1299 = vadd.f32 %v327, %v1290
        %v1300 = vadd.f32 %v328, %v1206
        %v1301 = vadd.f32 %v329, %v1208
        %v1302 = vadd.f32 %v330, %v1292
        %v1303 = vadd.f32 %v331, %v1294
        %1304 = vst [vmem:[#allocation2] sm:$0xff] %v1296
        %1305 = vst [vmem:[#allocation2 + $0x8] sm:$0xff] %v1297
        %1306 = vst [vmem:[#allocation2 + $0x10] sm:$0xff] %v1298
        %1307 = vst [vmem:[#allocation2 + $0x18] sm:$0xff] %v1299
        %1308 = vst [vmem:[#allocation2 + $0x20] sm:$0xff] %v1300
        %1309 = vst [vmem:[#allocation2 + $0x28] sm:$0xff] %v1301
        %1310 = vst [vmem:[#allocation2 + $0x30] sm:$0xff] %v1302
        %1311 = vst [vmem:[#allocation2 + $0x38] sm:$0xff] %v1303
        %p1312 = scmp.eq.s32.totalorder %s28, 1
        // Predicated region
        $region57: #{tpu_custom_call.1} parent=39 // pred_check
          %p1313 = pneg %p1312
        $region58: #{tpu_custom_call.1} parent=39 // pred_check_branch
          %1315 = sbr.rel (%p1313) target = $region60
        $region59: #{tpu_custom_call.1} parent=39 // pred_region
          %v1316 = vld [vmem:[#allocation2] sm:$0xff]
          %v1317 = vld [vmem:[#allocation2 + $0x8] sm:$0xff]
          %v1318 = vld [vmem:[#allocation2 + $0x10] sm:$0xff]
          %v1319 = vld [vmem:[#allocation2 + $0x18] sm:$0xff]
          %v1320 = vld [vmem:[#allocation2 + $0x20] sm:$0xff]
          %v1321 = vld [vmem:[#allocation2 + $0x28] sm:$0xff]
          %v1322 = vld [vmem:[#allocation2 + $0x30] sm:$0xff]
          %v1323 = vld [vmem:[#allocation2 + $0x38] sm:$0xff]
          %v1324 = vld [vmem:[%s2] sm:$0xf]
          %v1326 = vlaneseq
          %v1327 = vshrl.u32 %v1326, 7
          %v1328 = vsub.s32 0, %v1327
          %v1329 = vrot.slane %v1324, %v1328
          %v1330 = vlaneseq
          %v1331 = vshrl.u32 %v1330, 7
          %v1332 = vsub.s32 1, %v1331
          %v1333 = vrot.slane %v1324, %v1332
          %v1334 = vlaneseq
          %v1335 = vshrl.u32 %v1334, 7
          %v1336 = vsub.s32 2, %v1335
          %v1337 = vrot.slane %v1324, %v1336
          %v1338 = vlaneseq
          %v1339 = vshrl.u32 %v1338, 7
          %v1340 = vsub.s32 3, %v1339
          %v1341 = vrot.slane %v1324, %v1340
          %v1346 = vadd.f32 %v1316, %v1329
          %v1347 = vadd.f32 %v1317, %v1333
          %v1348 = vadd.f32 %v1318, %v1337
          %v1349 = vadd.f32 %v1319, %v1341
          %v1350 = vadd.f32 %v1320, %v1329
          %v1351 = vadd.f32 %v1321, %v1333
          %v1352 = vadd.f32 %v1322, %v1337
          %v1353 = vadd.f32 %v1323, %v1341
          %v1354 = vpack.c.bf16 %v1350, %v1346
          %v1355 = vpack.c.bf16 %v1351, %v1347
          %v1356 = vpack.c.bf16 %v1352, %v1348
          %v1357 = vpack.c.bf16 %v1353, %v1349
          %v1358 = vld [vmem:[#allocation8] sm:$0xff]
          %v1359 = vld [vmem:[#allocation8 + $0x8] sm:$0xff]
          %v1360 = vld [vmem:[#allocation8 + $0x10] sm:$0xff]
          %v1361 = vld [vmem:[#allocation8 + $0x18] sm:$0xff]
          %v1362 = vld [vmem:[#allocation8 + $0x20] sm:$0xff]
          %v1363 = vld [vmem:[#allocation8 + $0x28] sm:$0xff]
          %v1364 = vld [vmem:[#allocation8 + $0x30] sm:$0xff]
          %v1365 = vld [vmem:[#allocation8 + $0x38] sm:$0xff]
          %v1366 = vld [vmem:[#allocation8 + $0x40] sm:$0xff]
          %v1367 = vld [vmem:[#allocation8 + $0x48] sm:$0xff]
          %v1368 = vld [vmem:[#allocation8 + $0x50] sm:$0xff]
          %v1369 = vld [vmem:[#allocation8 + $0x58] sm:$0xff]
          %v1370 = vld [vmem:[#allocation8 + $0x60] sm:$0xff]
          %v1371 = vld [vmem:[#allocation8 + $0x68] sm:$0xff]
          %v1372 = vld [vmem:[#allocation8 + $0x70] sm:$0xff]
          %v1373 = vld [vmem:[#allocation8 + $0x78] sm:$0xff]
          %v1374 = vld [vmem:[#allocation8 + $0x80] sm:$0xff]
          %v1375 = vld [vmem:[#allocation8 + $0x88] sm:$0xff]
          %v1376 = vld [vmem:[#allocation8 + $0x90] sm:$0xff]
          %v1377 = vld [vmem:[#allocation8 + $0x98] sm:$0xff]
          %v1378 = vld [vmem:[#allocation8 + $0xa0] sm:$0xff]
          %v1379 = vld [vmem:[#allocation8 + $0xa8] sm:$0xff]
          %v1380 = vld [vmem:[#allocation8 + $0xb0] sm:$0xff]
          %v1381 = vld [vmem:[#allocation8 + $0xb8] sm:$0xff]
          %v1382 = vld [vmem:[#allocation8 + $0xc0] sm:$0xff]
          %v1383 = vld [vmem:[#allocation8 + $0xc8] sm:$0xff]
          %v1384 = vld [vmem:[#allocation8 + $0xd0] sm:$0xff]
          %v1385 = vld [vmem:[#allocation8 + $0xd8] sm:$0xff]
          %v1386 = vld [vmem:[#allocation8 + $0xe0] sm:$0xff]
          %v1387 = vld [vmem:[#allocation8 + $0xe8] sm:$0xff]
          %v1388 = vld [vmem:[#allocation8 + $0xf0] sm:$0xff]
          %v1389 = vld [vmem:[#allocation8 + $0xf8] sm:$0xff]
          %v1390 = vld [vmem:[#allocation8 + $0x100] sm:$0xff]
          %v1391 = vld [vmem:[#allocation8 + $0x108] sm:$0xff]
          %v1392 = vld [vmem:[#allocation8 + $0x110] sm:$0xff]
          %v1393 = vld [vmem:[#allocation8 + $0x118] sm:$0xff]
          %v1394 = vld [vmem:[#allocation8 + $0x120] sm:$0xff]
          %v1395 = vld [vmem:[#allocation8 + $0x128] sm:$0xff]
          %v1396 = vld [vmem:[#allocation8 + $0x130] sm:$0xff]
          %v1397 = vld [vmem:[#allocation8 + $0x138] sm:$0xff]
          %v1398 = vld [vmem:[#allocation8 + $0x140] sm:$0xff]
          %v1399 = vld [vmem:[#allocation8 + $0x148] sm:$0xff]
          %v1400 = vld [vmem:[#allocation8 + $0x150] sm:$0xff]
          %v1401 = vld [vmem:[#allocation8 + $0x158] sm:$0xff]
          %v1402 = vld [vmem:[#allocation8 + $0x160] sm:$0xff]
          %v1403 = vld [vmem:[#allocation8 + $0x168] sm:$0xff]
          %v1404 = vld [vmem:[#allocation8 + $0x170] sm:$0xff]
          %v1405 = vld [vmem:[#allocation8 + $0x178] sm:$0xff]
          %v1406 = vld [vmem:[#allocation8 + $0x180] sm:$0xff]
          %v1407 = vld [vmem:[#allocation8 + $0x188] sm:$0xff]
          %v1408 = vld [vmem:[#allocation8 + $0x190] sm:$0xff]
          %v1409 = vld [vmem:[#allocation8 + $0x198] sm:$0xff]
          %v1410 = vld [vmem:[#allocation8 + $0x1a0] sm:$0xff]
          %v1411 = vld [vmem:[#allocation8 + $0x1a8] sm:$0xff]
          %v1412 = vld [vmem:[#allocation8 + $0x1b0] sm:$0xff]
          %v1413 = vld [vmem:[#allocation8 + $0x1b8] sm:$0xff]
          %v1414 = vld [vmem:[#allocation8 + $0x1c0] sm:$0xff]
          %v1415 = vld [vmem:[#allocation8 + $0x1c8] sm:$0xff]
          %v1416 = vld [vmem:[#allocation8 + $0x1d0] sm:$0xff]
          %v1417 = vld [vmem:[#allocation8 + $0x1d8] sm:$0xff]
          %v1418 = vld [vmem:[#allocation8 + $0x1e0] sm:$0xff]
          %v1419 = vld [vmem:[#allocation8 + $0x1e8] sm:$0xff]
          %v1420 = vld [vmem:[#allocation8 + $0x1f0] sm:$0xff]
          %v1421 = vld [vmem:[#allocation8 + $0x1f8] sm:$0xff]
          %v1422 = vld [vmem:[#allocation8 + $0x200] sm:$0xff]
          %v1423 = vld [vmem:[#allocation8 + $0x208] sm:$0xff]
          %v1424 = vld [vmem:[#allocation8 + $0x210] sm:$0xff]
          %v1425 = vld [vmem:[#allocation8 + $0x218] sm:$0xff]
          %v1426 = vld [vmem:[#allocation8 + $0x220] sm:$0xff]
          %v1427 = vld [vmem:[#allocation8 + $0x228] sm:$0xff]
          %v1428 = vld [vmem:[#allocation8 + $0x230] sm:$0xff]
          %v1429 = vld [vmem:[#allocation8 + $0x238] sm:$0xff]
          %v1430 = vld [vmem:[#allocation8 + $0x240] sm:$0xff]
          %v1431 = vld [vmem:[#allocation8 + $0x248] sm:$0xff]
          %v1432 = vld [vmem:[#allocation8 + $0x250] sm:$0xff]
          %v1433 = vld [vmem:[#allocation8 + $0x258] sm:$0xff]
          %v1434 = vld [vmem:[#allocation8 + $0x260] sm:$0xff]
          %v1435 = vld [vmem:[#allocation8 + $0x268] sm:$0xff]
          %v1436 = vld [vmem:[#allocation8 + $0x270] sm:$0xff]
          %v1437 = vld [vmem:[#allocation8 + $0x278] sm:$0xff]
          %v1438 = vld [vmem:[#allocation8 + $0x280] sm:$0xff]
          %v1439 = vld [vmem:[#allocation8 + $0x288] sm:$0xff]
          %v1440 = vld [vmem:[#allocation8 + $0x290] sm:$0xff]
          %v1441 = vld [vmem:[#allocation8 + $0x298] sm:$0xff]
          %v1442 = vld [vmem:[#allocation8 + $0x2a0] sm:$0xff]
          %v1443 = vld [vmem:[#allocation8 + $0x2a8] sm:$0xff]
          %v1444 = vld [vmem:[#allocation8 + $0x2b0] sm:$0xff]
          %v1445 = vld [vmem:[#allocation8 + $0x2b8] sm:$0xff]
          %v1446 = vld [vmem:[#allocation8 + $0x2c0] sm:$0xff]
          %v1447 = vld [vmem:[#allocation8 + $0x2c8] sm:$0xff]
          %v1448 = vld [vmem:[#allocation8 + $0x2d0] sm:$0xff]
          %v1449 = vld [vmem:[#allocation8 + $0x2d8] sm:$0xff]
          %v1450 = vld [vmem:[#allocation8 + $0x2e0] sm:$0xff]
          %v1451 = vld [vmem:[#allocation8 + $0x2e8] sm:$0xff]
          %v1452 = vld [vmem:[#allocation8 + $0x2f0] sm:$0xff]
          %v1453 = vld [vmem:[#allocation8 + $0x2f8] sm:$0xff]
          %v1454 = vld [vmem:[#allocation8 + $0x300] sm:$0xff]
          %v1455 = vld [vmem:[#allocation8 + $0x308] sm:$0xff]
          %v1456 = vld [vmem:[#allocation8 + $0x310] sm:$0xff]
          %v1457 = vld [vmem:[#allocation8 + $0x318] sm:$0xff]
          %v1458 = vld [vmem:[#allocation8 + $0x320] sm:$0xff]
          %v1459 = vld [vmem:[#allocation8 + $0x328] sm:$0xff]
          %v1460 = vld [vmem:[#allocation8 + $0x330] sm:$0xff]
          %v1461 = vld [vmem:[#allocation8 + $0x338] sm:$0xff]
          %v1462 = vld [vmem:[#allocation8 + $0x340] sm:$0xff]
          %v1463 = vld [vmem:[#allocation8 + $0x348] sm:$0xff]
          %v1464 = vld [vmem:[#allocation8 + $0x350] sm:$0xff]
          %v1465 = vld [vmem:[#allocation8 + $0x358] sm:$0xff]
          %v1466 = vld [vmem:[#allocation8 + $0x360] sm:$0xff]
          %v1467 = vld [vmem:[#allocation8 + $0x368] sm:$0xff]
          %v1468 = vld [vmem:[#allocation8 + $0x370] sm:$0xff]
          %v1469 = vld [vmem:[#allocation8 + $0x378] sm:$0xff]
          %v1470 = vld [vmem:[#allocation8 + $0x380] sm:$0xff]
          %v1471 = vld [vmem:[#allocation8 + $0x388] sm:$0xff]
          %v1472 = vld [vmem:[#allocation8 + $0x390] sm:$0xff]
          %v1473 = vld [vmem:[#allocation8 + $0x398] sm:$0xff]
          %v1474 = vld [vmem:[#allocation8 + $0x3a0] sm:$0xff]
          %v1475 = vld [vmem:[#allocation8 + $0x3a8] sm:$0xff]
          %v1476 = vld [vmem:[#allocation8 + $0x3b0] sm:$0xff]
          %v1477 = vld [vmem:[#allocation8 + $0x3b8] sm:$0xff]
          %v1478 = vld [vmem:[#allocation8 + $0x3c0] sm:$0xff]
          %v1479 = vld [vmem:[#allocation8 + $0x3c8] sm:$0xff]
          %v1480 = vld [vmem:[#allocation8 + $0x3d0] sm:$0xff]
          %v1481 = vld [vmem:[#allocation8 + $0x3d8] sm:$0xff]
          %v1482 = vld [vmem:[#allocation8 + $0x3e0] sm:$0xff]
          %v1483 = vld [vmem:[#allocation8 + $0x3e8] sm:$0xff]
          %v1484 = vld [vmem:[#allocation8 + $0x3f0] sm:$0xff]
          %v1485 = vld [vmem:[#allocation8 + $0x3f8] sm:$0xff]
          %v1486 = vld [vmem:[%s4] sm:$0xf]
          %v1488 = vlaneseq
          %v1489 = vshrl.u32 %v1488, 7
          %v1490 = vsub.s32 0, %v1489
          %v1491 = vrot.slane %v1486, %v1490
          %v1492 = vlaneseq
          %v1493 = vshrl.u32 %v1492, 7
          %v1494 = vsub.s32 1, %v1493
          %v1495 = vrot.slane %v1486, %v1494
          %v1496 = vlaneseq
          %v1497 = vshrl.u32 %v1496, 7
          %v1498 = vsub.s32 2, %v1497
          %v1499 = vrot.slane %v1486, %v1498
          %v1500 = vlaneseq
          %v1501 = vshrl.u32 %v1500, 7
          %v1502 = vsub.s32 3, %v1501
          %v1503 = vrot.slane %v1486, %v1502
          %v1636 = vunpack.c.l.b16 %v1358
          %v1637 = vunpack.c.h.b16 %v1358
          %v1638 = vunpack.c.l.b16 %v1359
          %v1639 = vunpack.c.h.b16 %v1359
          %v1640 = vunpack.c.l.b16 %v1360
          %v1641 = vunpack.c.h.b16 %v1360
          %v1642 = vunpack.c.l.b16 %v1361
          %v1643 = vunpack.c.h.b16 %v1361
          %v1644 = vunpack.c.l.b16 %v1362
          %v1645 = vunpack.c.h.b16 %v1362
          %v1646 = vunpack.c.l.b16 %v1363
          %v1647 = vunpack.c.h.b16 %v1363
          %v1648 = vunpack.c.l.b16 %v1364
          %v1649 = vunpack.c.h.b16 %v1364
          %v1650 = vunpack.c.l.b16 %v1365
          %v1651 = vunpack.c.h.b16 %v1365
          %v1652 = vunpack.c.l.b16 %v1366
          %v1653 = vunpack.c.h.b16 %v1366
          %v1654 = vunpack.c.l.b16 %v1367
          %v1655 = vunpack.c.h.b16 %v1367
          %v1656 = vunpack.c.l.b16 %v1368
          %v1657 = vunpack.c.h.b16 %v1368
          %v1658 = vunpack.c.l.b16 %v1369
          %v1659 = vunpack.c.h.b16 %v1369
          %v1660 = vunpack.c.l.b16 %v1370
          %v1661 = vunpack.c.h.b16 %v1370
          %v1662 = vunpack.c.l.b16 %v1371
          %v1663 = vunpack.c.h.b16 %v1371
          %v1664 = vunpack.c.l.b16 %v1372
          %v1665 = vunpack.c.h.b16 %v1372
          %v1666 = vunpack.c.l.b16 %v1373
          %v1667 = vunpack.c.h.b16 %v1373
          %v1668 = vunpack.c.l.b16 %v1374
          %v1669 = vunpack.c.h.b16 %v1374
          %v1670 = vunpack.c.l.b16 %v1375
          %v1671 = vunpack.c.h.b16 %v1375
          %v1672 = vunpack.c.l.b16 %v1376
          %v1673 = vunpack.c.h.b16 %v1376
          %v1674 = vunpack.c.l.b16 %v1377
          %v1675 = vunpack.c.h.b16 %v1377
          %v1676 = vunpack.c.l.b16 %v1378
          %v1677 = vunpack.c.h.b16 %v1378
          %v1678 = vunpack.c.l.b16 %v1379
          %v1679 = vunpack.c.h.b16 %v1379
          %v1680 = vunpack.c.l.b16 %v1380
          %v1681 = vunpack.c.h.b16 %v1380
          %v1682 = vunpack.c.l.b16 %v1381
          %v1683 = vunpack.c.h.b16 %v1381
          %v1684 = vunpack.c.l.b16 %v1382
          %v1685 = vunpack.c.h.b16 %v1382
          %v1686 = vunpack.c.l.b16 %v1383
          %v1687 = vunpack.c.h.b16 %v1383
          %v1688 = vunpack.c.l.b16 %v1384
          %v1689 = vunpack.c.h.b16 %v1384
          %v1690 = vunpack.c.l.b16 %v1385
          %v1691 = vunpack.c.h.b16 %v1385
          %v1692 = vunpack.c.l.b16 %v1386
          %v1693 = vunpack.c.h.b16 %v1386
          %v1694 = vunpack.c.l.b16 %v1387
          %v1695 = vunpack.c.h.b16 %v1387
          %v1696 = vunpack.c.l.b16 %v1388
          %v1697 = vunpack.c.h.b16 %v1388
          %v1698 = vunpack.c.l.b16 %v1389
          %v1699 = vunpack.c.h.b16 %v1389
          %v1700 = vunpack.c.l.b16 %v1390
          %v1701 = vunpack.c.h.b16 %v1390
          %v1702 = vunpack.c.l.b16 %v1391
          %v1703 = vunpack.c.h.b16 %v1391
          %v1704 = vunpack.c.l.b16 %v1392
          %v1705 = vunpack.c.h.b16 %v1392
          %v1706 = vunpack.c.l.b16 %v1393
          %v1707 = vunpack.c.h.b16 %v1393
          %v1708 = vunpack.c.l.b16 %v1394
          %v1709 = vunpack.c.h.b16 %v1394
          %v1710 = vunpack.c.l.b16 %v1395
          %v1711 = vunpack.c.h.b16 %v1395
          %v1712 = vunpack.c.l.b16 %v1396
          %v1713 = vunpack.c.h.b16 %v1396
          %v1714 = vunpack.c.l.b16 %v1397
          %v1715 = vunpack.c.h.b16 %v1397
          %v1716 = vunpack.c.l.b16 %v1398
          %v1717 = vunpack.c.h.b16 %v1398
          %v1718 = vunpack.c.l.b16 %v1399
          %v1719 = vunpack.c.h.b16 %v1399
          %v1720 = vunpack.c.l.b16 %v1400
          %v1721 = vunpack.c.h.b16 %v1400
          %v1722 = vunpack.c.l.b16 %v1401
          %v1723 = vunpack.c.h.b16 %v1401
          %v1724 = vunpack.c.l.b16 %v1402
          %v1725 = vunpack.c.h.b16 %v1402
          %v1726 = vunpack.c.l.b16 %v1403
          %v1727 = vunpack.c.h.b16 %v1403
          %v1728 = vunpack.c.l.b16 %v1404
          %v1729 = vunpack.c.h.b16 %v1404
          %v1730 = vunpack.c.l.b16 %v1405
          %v1731 = vunpack.c.h.b16 %v1405
          %v1732 = vunpack.c.l.b16 %v1406
          %v1733 = vunpack.c.h.b16 %v1406
          %v1734 = vunpack.c.l.b16 %v1407
          %v1735 = vunpack.c.h.b16 %v1407
          %v1736 = vunpack.c.l.b16 %v1408
          %v1737 = vunpack.c.h.b16 %v1408
          %v1738 = vunpack.c.l.b16 %v1409
          %v1739 = vunpack.c.h.b16 %v1409
          %v1740 = vunpack.c.l.b16 %v1410
          %v1741 = vunpack.c.h.b16 %v1410
          %v1742 = vunpack.c.l.b16 %v1411
          %v1743 = vunpack.c.h.b16 %v1411
          %v1744 = vunpack.c.l.b16 %v1412
          %v1745 = vunpack.c.h.b16 %v1412
          %v1746 = vunpack.c.l.b16 %v1413
          %v1747 = vunpack.c.h.b16 %v1413
          %v1748 = vunpack.c.l.b16 %v1414
          %v1749 = vunpack.c.h.b16 %v1414
          %v1750 = vunpack.c.l.b16 %v1415
          %v1751 = vunpack.c.h.b16 %v1415
          %v1752 = vunpack.c.l.b16 %v1416
          %v1753 = vunpack.c.h.b16 %v1416
          %v1754 = vunpack.c.l.b16 %v1417
          %v1755 = vunpack.c.h.b16 %v1417
          %v1756 = vunpack.c.l.b16 %v1418
          %v1757 = vunpack.c.h.b16 %v1418
          %v1758 = vunpack.c.l.b16 %v1419
          %v1759 = vunpack.c.h.b16 %v1419
          %v1760 = vunpack.c.l.b16 %v1420
          %v1761 = vunpack.c.h.b16 %v1420
          %v1762 = vunpack.c.l.b16 %v1421
          %v1763 = vunpack.c.h.b16 %v1421
          %v1764 = vunpack.c.l.b16 %v1422
          %v1765 = vunpack.c.h.b16 %v1422
          %v1766 = vunpack.c.l.b16 %v1423
          %v1767 = vunpack.c.h.b16 %v1423
          %v1768 = vunpack.c.l.b16 %v1424
          %v1769 = vunpack.c.h.b16 %v1424
          %v1770 = vunpack.c.l.b16 %v1425
          %v1771 = vunpack.c.h.b16 %v1425
          %v1772 = vunpack.c.l.b16 %v1426
          %v1773 = vunpack.c.h.b16 %v1426
          %v1774 = vunpack.c.l.b16 %v1427
          %v1775 = vunpack.c.h.b16 %v1427
          %v1776 = vunpack.c.l.b16 %v1428
          %v1777 = vunpack.c.h.b16 %v1428
          %v1778 = vunpack.c.l.b16 %v1429
          %v1779 = vunpack.c.h.b16 %v1429
          %v1780 = vunpack.c.l.b16 %v1430
          %v1781 = vunpack.c.h.b16 %v1430
          %v1782 = vunpack.c.l.b16 %v1431
          %v1783 = vunpack.c.h.b16 %v1431
          %v1784 = vunpack.c.l.b16 %v1432
          %v1785 = vunpack.c.h.b16 %v1432
          %v1786 = vunpack.c.l.b16 %v1433
          %v1787 = vunpack.c.h.b16 %v1433
          %v1788 = vunpack.c.l.b16 %v1434
          %v1789 = vunpack.c.h.b16 %v1434
          %v1790 = vunpack.c.l.b16 %v1435
          %v1791 = vunpack.c.h.b16 %v1435
          %v1792 = vunpack.c.l.b16 %v1436
          %v1793 = vunpack.c.h.b16 %v1436
          %v1794 = vunpack.c.l.b16 %v1437
          %v1795 = vunpack.c.h.b16 %v1437
          %v1796 = vunpack.c.l.b16 %v1438
          %v1797 = vunpack.c.h.b16 %v1438
          %v1798 = vunpack.c.l.b16 %v1439
          %v1799 = vunpack.c.h.b16 %v1439
          %v1800 = vunpack.c.l.b16 %v1440
          %v1801 = vunpack.c.h.b16 %v1440
          %v1802 = vunpack.c.l.b16 %v1441
          %v1803 = vunpack.c.h.b16 %v1441
          %v1804 = vunpack.c.l.b16 %v1442
          %v1805 = vunpack.c.h.b16 %v1442
          %v1806 = vunpack.c.l.b16 %v1443
          %v1807 = vunpack.c.h.b16 %v1443
          %v1808 = vunpack.c.l.b16 %v1444
          %v1809 = vunpack.c.h.b16 %v1444
          %v1810 = vunpack.c.l.b16 %v1445
          %v1811 = vunpack.c.h.b16 %v1445
          %v1812 = vunpack.c.l.b16 %v1446
          %v1813 = vunpack.c.h.b16 %v1446
          %v1814 = vunpack.c.l.b16 %v1447
          %v1815 = vunpack.c.h.b16 %v1447
          %v1816 = vunpack.c.l.b16 %v1448
          %v1817 = vunpack.c.h.b16 %v1448
          %v1818 = vunpack.c.l.b16 %v1449
          %v1819 = vunpack.c.h.b16 %v1449
          %v1820 = vunpack.c.l.b16 %v1450
          %v1821 = vunpack.c.h.b16 %v1450
          %v1822 = vunpack.c.l.b16 %v1451
          %v1823 = vunpack.c.h.b16 %v1451
          %v1824 = vunpack.c.l.b16 %v1452
          %v1825 = vunpack.c.h.b16 %v1452
          %v1826 = vunpack.c.l.b16 %v1453
          %v1827 = vunpack.c.h.b16 %v1453
          %v1828 = vunpack.c.l.b16 %v1454
          %v1829 = vunpack.c.h.b16 %v1454
          %v1830 = vunpack.c.l.b16 %v1455
          %v1831 = vunpack.c.h.b16 %v1455
          %v1832 = vunpack.c.l.b16 %v1456
          %v1833 = vunpack.c.h.b16 %v1456
          %v1834 = vunpack.c.l.b16 %v1457
          %v1835 = vunpack.c.h.b16 %v1457
          %v1836 = vunpack.c.l.b16 %v1458
          %v1837 = vunpack.c.h.b16 %v1458
          %v1838 = vunpack.c.l.b16 %v1459
          %v1839 = vunpack.c.h.b16 %v1459
          %v1840 = vunpack.c.l.b16 %v1460
          %v1841 = vunpack.c.h.b16 %v1460
          %v1842 = vunpack.c.l.b16 %v1461
          %v1843 = vunpack.c.h.b16 %v1461
          %v1844 = vunpack.c.l.b16 %v1462
          %v1845 = vunpack.c.h.b16 %v1462
          %v1846 = vunpack.c.l.b16 %v1463
          %v1847 = vunpack.c.h.b16 %v1463
          %v1848 = vunpack.c.l.b16 %v1464
          %v1849 = vunpack.c.h.b16 %v1464
          %v1850 = vunpack.c.l.b16 %v1465
          %v1851 = vunpack.c.h.b16 %v1465
          %v1852 = vunpack.c.l.b16 %v1466
          %v1853 = vunpack.c.h.b16 %v1466
          %v1854 = vunpack.c.l.b16 %v1467
          %v1855 = vunpack.c.h.b16 %v1467
          %v1856 = vunpack.c.l.b16 %v1468
          %v1857 = vunpack.c.h.b16 %v1468
          %v1858 = vunpack.c.l.b16 %v1469
          %v1859 = vunpack.c.h.b16 %v1469
          %v1860 = vunpack.c.l.b16 %v1470
          %v1861 = vunpack.c.h.b16 %v1470
          %v1862 = vunpack.c.l.b16 %v1471
          %v1863 = vunpack.c.h.b16 %v1471
          %v1864 = vunpack.c.l.b16 %v1472
          %v1865 = vunpack.c.h.b16 %v1472
          %v1866 = vunpack.c.l.b16 %v1473
          %v1867 = vunpack.c.h.b16 %v1473
          %v1868 = vunpack.c.l.b16 %v1474
          %v1869 = vunpack.c.h.b16 %v1474
          %v1870 = vunpack.c.l.b16 %v1475
          %v1871 = vunpack.c.h.b16 %v1475
          %v1872 = vunpack.c.l.b16 %v1476
          %v1873 = vunpack.c.h.b16 %v1476
          %v1874 = vunpack.c.l.b16 %v1477
          %v1875 = vunpack.c.h.b16 %v1477
          %v1876 = vunpack.c.l.b16 %v1478
          %v1877 = vunpack.c.h.b16 %v1478
          %v1878 = vunpack.c.l.b16 %v1479
          %v1879 = vunpack.c.h.b16 %v1479
          %v1880 = vunpack.c.l.b16 %v1480
          %v1881 = vunpack.c.h.b16 %v1480
          %v1882 = vunpack.c.l.b16 %v1481
          %v1883 = vunpack.c.h.b16 %v1481
          %v1884 = vunpack.c.l.b16 %v1482
          %v1885 = vunpack.c.h.b16 %v1482
          %v1886 = vunpack.c.l.b16 %v1483
          %v1887 = vunpack.c.h.b16 %v1483
          %v1888 = vunpack.c.l.b16 %v1484
          %v1889 = vunpack.c.h.b16 %v1484
          %v1890 = vunpack.c.l.b16 %v1485
          %v1891 = vunpack.c.h.b16 %v1485
          %v1892 = vpack.c.b16 %v1640, %v1636
          %v1893 = vpack.c.b16 %v1641, %v1637
          %v1894 = vpack.c.b16 %v1642, %v1638
          %v1895 = vpack.c.b16 %v1643, %v1639
          %v1896 = vpack.c.b16 %v1648, %v1644
          %v1897 = vpack.c.b16 %v1649, %v1645
          %v1898 = vpack.c.b16 %v1650, %v1646
          %v1899 = vpack.c.b16 %v1651, %v1647
          %v1900 = vpack.c.b16 %v1656, %v1652
          %v1901 = vpack.c.b16 %v1657, %v1653
          %v1902 = vpack.c.b16 %v1658, %v1654
          %v1903 = vpack.c.b16 %v1659, %v1655
          %v1904 = vpack.c.b16 %v1664, %v1660
          %v1905 = vpack.c.b16 %v1665, %v1661
          %v1906 = vpack.c.b16 %v1666, %v1662
          %v1907 = vpack.c.b16 %v1667, %v1663
          %v1908 = vpack.c.b16 %v1672, %v1668
          %v1909 = vpack.c.b16 %v1673, %v1669
          %v1910 = vpack.c.b16 %v1674, %v1670
          %v1911 = vpack.c.b16 %v1675, %v1671
          %v1912 = vpack.c.b16 %v1680, %v1676
          %v1913 = vpack.c.b16 %v1681, %v1677
          %v1914 = vpack.c.b16 %v1682, %v1678
          %v1915 = vpack.c.b16 %v1683, %v1679
          %v1916 = vpack.c.b16 %v1688, %v1684
          %v1917 = vpack.c.b16 %v1689, %v1685
          %v1918 = vpack.c.b16 %v1690, %v1686
          %v1919 = vpack.c.b16 %v1691, %v1687
          %v1920 = vpack.c.b16 %v1696, %v1692
          %v1921 = vpack.c.b16 %v1697, %v1693
          %v1922 = vpack.c.b16 %v1698, %v1694
          %v1923 = vpack.c.b16 %v1699, %v1695
          %v1924 = vpack.c.b16 %v1704, %v1700
          %v1925 = vpack.c.b16 %v1705, %v1701
          %v1926 = vpack.c.b16 %v1706, %v1702
          %v1927 = vpack.c.b16 %v1707, %v1703
          %v1928 = vpack.c.b16 %v1712, %v1708
          %v1929 = vpack.c.b16 %v1713, %v1709
          %v1930 = vpack.c.b16 %v1714, %v1710
          %v1931 = vpack.c.b16 %v1715, %v1711
          %v1932 = vpack.c.b16 %v1720, %v1716
          %v1933 = vpack.c.b16 %v1721, %v1717
          %v1934 = vpack.c.b16 %v1722, %v1718
          %v1935 = vpack.c.b16 %v1723, %v1719
          %v1936 = vpack.c.b16 %v1728, %v1724
          %v1937 = vpack.c.b16 %v1729, %v1725
          %v1938 = vpack.c.b16 %v1730, %v1726
          %v1939 = vpack.c.b16 %v1731, %v1727
          %v1940 = vpack.c.b16 %v1736, %v1732
          %v1941 = vpack.c.b16 %v1737, %v1733
          %v1942 = vpack.c.b16 %v1738, %v1734
          %v1943 = vpack.c.b16 %v1739, %v1735
          %v1944 = vpack.c.b16 %v1744, %v1740
          %v1945 = vpack.c.b16 %v1745, %v1741
          %v1946 = vpack.c.b16 %v1746, %v1742
          %v1947 = vpack.c.b16 %v1747, %v1743
          %v1948 = vpack.c.b16 %v1752, %v1748
          %v1949 = vpack.c.b16 %v1753, %v1749
          %v1950 = vpack.c.b16 %v1754, %v1750
          %v1951 = vpack.c.b16 %v1755, %v1751
          %v1952 = vpack.c.b16 %v1760, %v1756
          %v1953 = vpack.c.b16 %v1761, %v1757
          %v1954 = vpack.c.b16 %v1762, %v1758
          %v1955 = vpack.c.b16 %v1763, %v1759
          %v1956 = vpack.c.b16 %v1768, %v1764
          %v1957 = vpack.c.b16 %v1769, %v1765
          %v1958 = vpack.c.b16 %v1770, %v1766
          %v1959 = vpack.c.b16 %v1771, %v1767
          %v1960 = vpack.c.b16 %v1776, %v1772
          %v1961 = vpack.c.b16 %v1777, %v1773
          %v1962 = vpack.c.b16 %v1778, %v1774
          %v1963 = vpack.c.b16 %v1779, %v1775
          %v1964 = vpack.c.b16 %v1784, %v1780
          %v1965 = vpack.c.b16 %v1785, %v1781
          %v1966 = vpack.c.b16 %v1786, %v1782
          %v1967 = vpack.c.b16 %v1787, %v1783
          %v1968 = vpack.c.b16 %v1792, %v1788
          %v1969 = vpack.c.b16 %v1793, %v1789
          %v1970 = vpack.c.b16 %v1794, %v1790
          %v1971 = vpack.c.b16 %v1795, %v1791
          %v1972 = vpack.c.b16 %v1800, %v1796
          %v1973 = vpack.c.b16 %v1801, %v1797
          %v1974 = vpack.c.b16 %v1802, %v1798
          %v1975 = vpack.c.b16 %v1803, %v1799
          %v1976 = vpack.c.b16 %v1808, %v1804
          %v1977 = vpack.c.b16 %v1809, %v1805
          %v1978 = vpack.c.b16 %v1810, %v1806
          %v1979 = vpack.c.b16 %v1811, %v1807
          %v1980 = vpack.c.b16 %v1816, %v1812
          %v1981 = vpack.c.b16 %v1817, %v1813
          %v1982 = vpack.c.b16 %v1818, %v1814
          %v1983 = vpack.c.b16 %v1819, %v1815
          %v1984 = vpack.c.b16 %v1824, %v1820
          %v1985 = vpack.c.b16 %v1825, %v1821
          %v1986 = vpack.c.b16 %v1826, %v1822
          %v1987 = vpack.c.b16 %v1827, %v1823
          %v1988 = vpack.c.b16 %v1832, %v1828
          %v1989 = vpack.c.b16 %v1833, %v1829
          %v1990 = vpack.c.b16 %v1834, %v1830
          %v1991 = vpack.c.b16 %v1835, %v1831
          %v1992 = vpack.c.b16 %v1840, %v1836
          %v1993 = vpack.c.b16 %v1841, %v1837
          %v1994 = vpack.c.b16 %v1842, %v1838
          %v1995 = vpack.c.b16 %v1843, %v1839
          %v1996 = vpack.c.b16 %v1848, %v1844
          %v1997 = vpack.c.b16 %v1849, %v1845
          %v1998 = vpack.c.b16 %v1850, %v1846
          %v1999 = vpack.c.b16 %v1851, %v1847
          %v2000 = vpack.c.b16 %v1856, %v1852
          %v2001 = vpack.c.b16 %v1857, %v1853
          %v2002 = vpack.c.b16 %v1858, %v1854
          %v2003 = vpack.c.b16 %v1859, %v1855
          %v2004 = vpack.c.b16 %v1864, %v1860
          %v2005 = vpack.c.b16 %v1865, %v1861
          %v2006 = vpack.c.b16 %v1866, %v1862
          %v2007 = vpack.c.b16 %v1867, %v1863
          %v2008 = vpack.c.b16 %v1872, %v1868
          %v2009 = vpack.c.b16 %v1873, %v1869
          %v2010 = vpack.c.b16 %v1874, %v1870
          %v2011 = vpack.c.b16 %v1875, %v1871
          %v2012 = vpack.c.b16 %v1880, %v1876
          %v2013 = vpack.c.b16 %v1881, %v1877
          %v2014 = vpack.c.b16 %v1882, %v1878
          %v2015 = vpack.c.b16 %v1883, %v1879
          %v2016 = vpack.c.b16 %v1888, %v1884
          %v2017 = vpack.c.b16 %v1889, %v1885
          %v2018 = vpack.c.b16 %v1890, %v1886
          %v2019 = vpack.c.b16 %v1891, %v1887
          %2148 = vmatprep.subr.bf16.mxu0 %v1893
          %2149 = vmatpush1.bf16.msra.mxu0 %v1892
          %2150 = vmatprep.subr.bf16.mxu0 %v1897
          %2151 = vmatpush1.bf16.msra.mxu0 %v1896
          %2152 = vmatprep.subr.bf16.mxu0 %v1901
          %2153 = vmatpush1.bf16.msra.mxu0 %v1900
          %2154 = vmatprep.subr.bf16.mxu0 %v1905
          %2155 = vmatpush1.bf16.msra.mxu0 %v1904
          %2156 = vmatprep.subr.bf16.mxu0 %v1909
          %2157 = vmatpush1.bf16.msra.mxu0 %v1908
          %2158 = vmatprep.subr.bf16.mxu0 %v1913
          %2159 = vmatpush1.bf16.msra.mxu0 %v1912
          %2160 = vmatprep.subr.bf16.mxu0 %v1917
          %2161 = vmatpush1.bf16.msra.mxu0 %v1916
          %2162 = vmatprep.subr.bf16.mxu0 %v1921
          %2163 = vmatpush1.bf16.msra.mxu0 %v1920
          %2164 = vmatprep.subr.bf16.mxu0 %v1925
          %2165 = vmatpush1.bf16.msra.mxu0 %v1924
          %2166 = vmatprep.subr.bf16.mxu0 %v1929
          %2167 = vmatpush1.bf16.msra.mxu0 %v1928
          %2168 = vmatprep.subr.bf16.mxu0 %v1933
          %2169 = vmatpush1.bf16.msra.mxu0 %v1932
          %2170 = vmatprep.subr.bf16.mxu0 %v1937
          %2171 = vmatpush1.bf16.msra.mxu0 %v1936
          %2172 = vmatprep.subr.bf16.mxu0 %v1941
          %2173 = vmatpush1.bf16.msra.mxu0 %v1940
          %2174 = vmatprep.subr.bf16.mxu0 %v1945
          %2175 = vmatpush1.bf16.msra.mxu0 %v1944
          %2176 = vmatprep.subr.bf16.mxu0 %v1949
          %2177 = vmatpush1.bf16.msra.mxu0 %v1948
          %2178 = vmatprep.subr.bf16.mxu0 %v1953
          %2179 = vmatpush1.bf16.msra.mxu0 %v1952
          %2180 = vmatprep.mubr.bf16.mxu0 %v1355
          %2181 = vmatmul.mubr.bf16.gmra.mrb[0].mxu0 %v1354
          %v2182 = vpop.f32.mrb[0].mxu0
          %v2183 = vadd.f32 %v1491, %v2182
          %v2184 = vpop.f32.mrb[0].mxu0
          %v2185 = vadd.f32 %v1495, %v2184
          %v2186 = vpop.f32.mrb[0].mxu0
          %v2187 = vadd.f32 %v1491, %v2186
          %v2188 = vpop.f32.mrb[0].mxu0
          %v2189 = vadd.f32 %v1495, %v2188
          %2190 = vdwg.mxu0
          %2191 = vmatprep.subr.bf16.mxu0 %v1957
          %2192 = vmatpush1.bf16.msra.mxu0 %v1956
          %2193 = vmatprep.subr.bf16.mxu0 %v1961
          %2194 = vmatpush1.bf16.msra.mxu0 %v1960
          %2195 = vmatprep.subr.bf16.mxu0 %v1965
          %2196 = vmatpush1.bf16.msra.mxu0 %v1964
          %2197 = vmatprep.subr.bf16.mxu0 %v1969
          %2198 = vmatpush1.bf16.msra.mxu0 %v1968
          %2199 = vmatprep.subr.bf16.mxu0 %v1973
          %2200 = vmatpush1.bf16.msra.mxu0 %v1972
          %2201 = vmatprep.subr.bf16.mxu0 %v1977
          %2202 = vmatpush1.bf16.msra.mxu0 %v1976
          %2203 = vmatprep.subr.bf16.mxu0 %v1981
          %2204 = vmatpush1.bf16.msra.mxu0 %v1980
          %2205 = vmatprep.subr.bf16.mxu0 %v1985
          %2206 = vmatpush1.bf16.msra.mxu0 %v1984
          %2207 = vmatprep.subr.bf16.mxu0 %v1989
          %2208 = vmatpush1.bf16.msra.mxu0 %v1988
          %2209 = vmatprep.subr.bf16.mxu0 %v1993
          %2210 = vmatpush1.bf16.msra.mxu0 %v1992
          %2211 = vmatprep.subr.bf16.mxu0 %v1997
          %2212 = vmatpush1.bf16.msra.mxu0 %v1996
          %2213 = vmatprep.subr.bf16.mxu0 %v2001
          %2214 = vmatpush1.bf16.msra.mxu0 %v2000
          %2215 = vmatprep.subr.bf16.mxu0 %v2005
          %2216 = vmatpush1.bf16.msra.mxu0 %v2004
          %2217 = vmatprep.subr.bf16.mxu0 %v2009
          %2218 = vmatpush1.bf16.msra.mxu0 %v2008
          %2219 = vmatprep.subr.bf16.mxu0 %v2013
          %2220 = vmatpush1.bf16.msra.mxu0 %v2012
          %2221 = vmatprep.subr.bf16.mxu0 %v2017
          %2222 = vmatpush1.bf16.msra.mxu0 %v2016
          %2223 = vmatprep.mubr.bf16.mxu0 %v1357
          %2224 = vmatmul.mubr.bf16.gmra.mrb[0].mxu0 %v1356
          %v2225 = vpop.f32.mrb[0].mxu0
          %v2226 = vadd.f32 %v2183, %v2225
          %v2227 = vpop.f32.mrb[0].mxu0
          %v2228 = vadd.f32 %v2185, %v2227
          %v2229 = vpop.f32.mrb[0].mxu0
          %v2230 = vadd.f32 %v2187, %v2229
          %v2231 = vpop.f32.mrb[0].mxu0
          %v2232 = vadd.f32 %v2189, %v2231
          %2233 = vdwg.mxu0
          %2234 = vmatprep.subr.bf16.mxu0 %v1895
          %2235 = vmatpush1.bf16.msra.mxu0 %v1894
          %2236 = vmatprep.subr.bf16.mxu0 %v1899
          %2237 = vmatpush1.bf16.msra.mxu0 %v1898
          %2238 = vmatprep.subr.bf16.mxu0 %v1903
          %2239 = vmatpush1.bf16.msra.mxu0 %v1902
          %2240 = vmatprep.subr.bf16.mxu0 %v1907
          %2241 = vmatpush1.bf16.msra.mxu0 %v1906
          %2242 = vmatprep.subr.bf16.mxu0 %v1911
          %2243 = vmatpush1.bf16.msra.mxu0 %v1910
          %2244 = vmatprep.subr.bf16.mxu0 %v1915
          %2245 = vmatpush1.bf16.msra.mxu0 %v1914
          %2246 = vmatprep.subr.bf16.mxu0 %v1919
          %2247 = vmatpush1.bf16.msra.mxu0 %v1918
          %2248 = vmatprep.subr.bf16.mxu0 %v1923
          %2249 = vmatpush1.bf16.msra.mxu0 %v1922
          %2250 = vmatprep.subr.bf16.mxu0 %v1927
          %2251 = vmatpush1.bf16.msra.mxu0 %v1926
          %2252 = vmatprep.subr.bf16.mxu0 %v1931
          %2253 = vmatpush1.bf16.msra.mxu0 %v1930
          %2254 = vmatprep.subr.bf16.mxu0 %v1935
          %2255 = vmatpush1.bf16.msra.mxu0 %v1934
          %2256 = vmatprep.subr.bf16.mxu0 %v1939
          %2257 = vmatpush1.bf16.msra.mxu0 %v1938
          %2258 = vmatprep.subr.bf16.mxu0 %v1943
          %2259 = vmatpush1.bf16.msra.mxu0 %v1942
          %2260 = vmatprep.subr.bf16.mxu0 %v1947
          %2261 = vmatpush1.bf16.msra.mxu0 %v1946
          %2262 = vmatprep.subr.bf16.mxu0 %v1951
          %2263 = vmatpush1.bf16.msra.mxu0 %v1950
          %2264 = vmatprep.subr.bf16.mxu0 %v1955
          %2265 = vmatpush1.bf16.msra.mxu0 %v1954
          %2266 = vmatprep.mubr.bf16.mxu0 %v1355
          %2267 = vmatmul.mubr.bf16.gmra.mrb[0].mxu0 %v1354
          %v2268 = vpop.f32.mrb[0].mxu0
          %v2269 = vadd.f32 %v1499, %v2268
          %v2270 = vpop.f32.mrb[0].mxu0
          %v2271 = vadd.f32 %v1503, %v2270
          %v2272 = vpop.f32.mrb[0].mxu0
          %v2273 = vadd.f32 %v1499, %v2272
          %v2274 = vpop.f32.mrb[0].mxu0
          %v2275 = vadd.f32 %v1503, %v2274
          %2276 = vdwg.mxu0
          %2277 = vmatprep.subr.bf16.mxu0 %v1959
          %2278 = vmatpush1.bf16.msra.mxu0 %v1958
          %2279 = vmatprep.subr.bf16.mxu0 %v1963
          %2280 = vmatpush1.bf16.msra.mxu0 %v1962
          %2281 = vmatprep.subr.bf16.mxu0 %v1967
          %2282 = vmatpush1.bf16.msra.mxu0 %v1966
          %2283 = vmatprep.subr.bf16.mxu0 %v1971
          %2284 = vmatpush1.bf16.msra.mxu0 %v1970
          %2285 = vmatprep.subr.bf16.mxu0 %v1975
          %2286 = vmatpush1.bf16.msra.mxu0 %v1974
          %2287 = vmatprep.subr.bf16.mxu0 %v1979
          %2288 = vmatpush1.bf16.msra.mxu0 %v1978
          %2289 = vmatprep.subr.bf16.mxu0 %v1983
          %2290 = vmatpush1.bf16.msra.mxu0 %v1982
          %2291 = vmatprep.subr.bf16.mxu0 %v1987
          %2292 = vmatpush1.bf16.msra.mxu0 %v1986
          %2293 = vmatprep.subr.bf16.mxu0 %v1991
          %2294 = vmatpush1.bf16.msra.mxu0 %v1990
          %2295 = vmatprep.subr.bf16.mxu0 %v1995
          %2296 = vmatpush1.bf16.msra.mxu0 %v1994
          %2297 = vmatprep.subr.bf16.mxu0 %v1999
          %2298 = vmatpush1.bf16.msra.mxu0 %v1998
          %2299 = vmatprep.subr.bf16.mxu0 %v2003
          %2300 = vmatpush1.bf16.msra.mxu0 %v2002
          %2301 = vmatprep.subr.bf16.mxu0 %v2007
          %2302 = vmatpush1.bf16.msra.mxu0 %v2006
          %2303 = vmatprep.subr.bf16.mxu0 %v2011
          %2304 = vmatpush1.bf16.msra.mxu0 %v2010
          %2305 = vmatprep.subr.bf16.mxu0 %v2015
          %2306 = vmatpush1.bf16.msra.mxu0 %v2014
          %2307 = vmatprep.subr.bf16.mxu0 %v2019
          %2308 = vmatpush1.bf16.msra.mxu0 %v2018
          %2309 = vmatprep.mubr.bf16.mxu0 %v1357
          %2310 = vmatmul.mubr.bf16.gmra.mrb[0].mxu0 %v1356
          %v2311 = vpop.f32.mrb[0].mxu0
          %v2312 = vadd.f32 %v2269, %v2311
          %v2313 = vpop.f32.mrb[0].mxu0
          %v2314 = vadd.f32 %v2271, %v2313
          %v2315 = vpop.f32.mrb[0].mxu0
          %v2316 = vadd.f32 %v2273, %v2315
          %v2317 = vpop.f32.mrb[0].mxu0
          %v2318 = vadd.f32 %v2275, %v2317
          %2319 = vdwg.mxu0
          %2320 = vst [vmem:[#allocation9] sm:$0xff] %v2226
          %2321 = vst [vmem:[#allocation9 + $0x8] sm:$0xff] %v2228
          %2322 = vst [vmem:[#allocation9 + $0x10] sm:$0xff] %v2312
          %2323 = vst [vmem:[#allocation9 + $0x18] sm:$0xff] %v2314
          %2324 = vst [vmem:[#allocation9 + $0x20] sm:$0xff] %v2230
          %2325 = vst [vmem:[#allocation9 + $0x28] sm:$0xff] %v2232
          %2326 = vst [vmem:[#allocation9 + $0x30] sm:$0xff] %v2316
          %2327 = vst [vmem:[#allocation9 + $0x38] sm:$0xff] %v2318
        $region60: #{tpu_custom_call.1} parent=39 // pred_fallthru
          _
        // Predicated region
        $region61: #{tpu_custom_call.1} parent=39 // pred_check
          %p2328 = pneg %p170
        $region62: #{tpu_custom_call.1} parent=39 // pred_check_branch
          %2330 = sbr.rel (%p2328) target = $region64
        $region63: #{tpu_custom_call.1} parent=39 // pred_region
          %s2331 = smul.u32 2, %s27
          %s2333 = ssub.s32 1024, 1024
          %2334 = vsyncadd [#allocation5], %s2333
          %s2335 = smul.addr %s2331, 4
          %s2336 = smul.addr %s2335, 128
          %s2337 = scalar_lea.hbm %s5, %s2336
          %s2338 = sshll.u32 [#allocation9], 4
          %s2339 = int_to_ptr.vmem [resolvable:$true] %s2338
          %2344 = dma.vmem_to_hbm [thread:$0]  %s2339, 1024, %s2337, [#allocation5], 512, 512, 32
        $region64: #{tpu_custom_call.1} parent=39 // pred_fallthru
          _
        // Predicated region
        $region65: #{tpu_custom_call.1} parent=39 // pred_check
          %p2345 = pneg %p170
        $region66: #{tpu_custom_call.1} parent=39 // pred_check_branch
          %2347 = sbr.rel (%p2345) target = $region68
        $region67: #{tpu_custom_call.1} parent=39 // pred_region
          %2348 = dma.done [#allocation5], 1024
        $region68: #{tpu_custom_call.1} parent=39 // pred_fallthru
          _
      $region40: #{tpu_custom_call.1} parent=5 // pred_fallthru
        _
      %p2349 = scmp.le.s32.totalorder 2, %s18
      // Predicated region
      $region69: #{tpu_custom_call.1} parent=5 // pred_check
        %p2350 = pneg %p2349
      $region70: #{tpu_custom_call.1} parent=5 // pred_check_branch
        %2352 = sbr.rel (%p2350) target = $region72
      $region71: #{tpu_custom_call.1} parent=5 // pred_region
        %s2353 = ssub.s32 %s18, 2
      $region72: #{tpu_custom_call.1} parent=5 // pred_fallthru
        _
    $region6: #{tpu_custom_call.1} parent=1 // loop_footer
      %s22 = sadd.s32 1, %s18
    $region7: #{tpu_custom_call.1} parent=1 // loop_footer_branch
      %17 = sbr.rel target = $region3
    $region8: #{tpu_custom_call.1} parent=1 // loop_exit
      _
    %2354 = vsyncpa [#allocation4], 1
    %s2355 = scalar_lea.sflag [#allocation4], 1
    %2356 = vsyncpa %s2355, 1
    %2357 = vsyncpa [#allocation7], 1
    %s2358 = scalar_lea.sflag [#allocation7], 1
    %2359 = vsyncpa %s2358, 1
    %2360 = vsyncpa [#allocation5], 1
    %s2361 = scalar_lea.sflag [#allocation5], 1
    %2362 = vsyncpa %s2361, 1

</llo_original>
